<compile_context>
chip_gen: v7x
topology: tpu7x:2x2x1
jax: 0.10.0
libtpu: 0.0.40
codegen_flags: <defaults>
</compile_context>

<pallas_src>
import functools

import jax
import jax.numpy as jnp
import numpy as np
from jax.experimental import pallas as pl
from jax.experimental.pallas import tpu as pltpu

NEG_INF = -1e9
NEG_SLOPE = 0.2                       # GATv2Conv default negative_slope
LN_EPS = 1e-5                         # torch.nn.LayerNorm default eps
LEAK_LIN = 0.5 * (1.0 + NEG_SLOPE)    # 0.6 : leaky(z) = LEAK_LIN*z + LEAK_ABS*|z|
LEAK_ABS = 0.5 * (1.0 - NEG_SLOPE)    # 0.4


# --------------------------------------------------------------------------
# Kernel 1: fused projections (per node tile)
# --------------------------------------------------------------------------
def _proj_kernel(x_ref, xT_ref, w_ref, b_ref, wlT_ref, blT_ref,
                 attbd_ref, attbdT_ref,
                 xl_ref, xr_ref, xlT_ref, ar_ref, alT_ref, *, d):
    # One fused MXU matmul for both lin_l and lin_r.
    xw = jnp.dot(x_ref[...], w_ref[...],
                 preferred_element_type=jnp.float32) + b_ref[...]      # [Tn, 2D]
    xl = xw[:, :d]                                                     # [Tn, D]
    xr = xw[:, d:]                                                     # [Tn, D]
    xl_ref[...] = xl
    xr_ref[...] = xr
    # Transposed x_l tile, computed as Wl^T @ x^T (avoids an in-kernel transpose).
    xlT = jnp.dot(wlT_ref[...], xT_ref[...],
                  preferred_element_type=jnp.float32) + blT_ref[...]   # [D, Tn]
    xlT_ref[...] = xlT
    # Linear (0.6*) part of the GATv2 logit: 0.6 * a_h.x_r  and  0.6 * a_h.x_l (transposed)
    ar_ref[...] = jnp.dot(xr, attbd_ref[...],
                          preferred_element_type=jnp.float32)          # [Tn, H]
    alT_ref[...] = jnp.dot(attbdT_ref[...], xlT,
                           preferred_element_type=jnp.float32)         # [H, Tn]


# --------------------------------------------------------------------------
# Kernel 2: tiled attention (online softmax) + LayerNorm + ReLU
# --------------------------------------------------------------------------
def _attn_kernel(attabs_ref, xr_ref, xlT_ref, xl_ref, ar_ref, alT_ref, mask_ref,
                 bias_ref, gamma_ref, beta_ref, out_ref,
                 m_scr, l_scr, acc_scr, *, heads, cph):
    j = pl.program_id(1)
    nj = pl.num_programs(1)

    @pl.when(j == 0)
    def _init():
        m_scr[...] = jnp.full(m_scr.shape, -jnp.inf, m_scr.dtype)
        l_scr[...] = jnp.zeros(l_scr.shape, l_scr.dtype)
        acc_scr[...] = jnp.zeros(acc_scr.shape, acc_scr.dtype)

    xr = xr_ref[...]                                       # [Ti, D] (targets)
    xlT = xlT_ref[...]                                     # [D, Tj] (sources, transposed)
    edge = mask_ref[...] != 0                              # [Ti, Tj] bool

    for h in range(heads):
        # linear part (already x0.6): outer sum of two precomputed vectors
        e = ar_ref[:, h:h + 1] + alT_ref[h:h + 1, :]       # [Ti, Tj]
        # |.| part: lane-dense [Ti, Tj] planes, one per channel of this head
        for cc in range(cph):
            d0 = h * cph + cc
            s = xr[:, d0:d0 + 1] + xlT[d0:d0 + 1, :]       # [Ti, Tj] broadcast outer sum
            e = e + attabs_ref[h, cc] * jnp.abs(s)         # attabs holds 0.4 * att
        e = jnp.where(edge, e, NEG_INF)                    # mask non-edges

        # ---- online softmax over source tiles (per target row, per head) ----
        m_prev = m_scr[:, h:h + 1]                         # [Ti, 1]
        m_new = jnp.maximum(m_prev, jnp.max(e, axis=1, keepdims=True))
        p = jnp.exp(e - m_new)                             # [Ti, Tj] (EUP)
        corr = jnp.exp(m_prev - m_new)                     # [Ti, 1]
        l_scr[:, h:h + 1] = corr * l_scr[:, h:h + 1] + jnp.sum(p, axis=1, keepdims=True)
        xl_h = xl_ref[:, h * cph:(h + 1) * cph]            # [Tj, C]
        acc_scr[:, h * cph:(h + 1) * cph] = (
            corr * acc_scr[:, h * cph:(h + 1) * cph]
            + jnp.dot(p, xl_h, preferred_element_type=jnp.float32))   # MXU
        m_scr[:, h:h + 1] = m_new

    @pl.when(j == nj - 1)
    def _finalize():
        # normalize each head by its softmax denominator (EUP reciprocal, not a divide)
        for h in range(heads):
            inv = pl.reciprocal(l_scr[:, h:h + 1], approx=True)
            acc_scr[:, h * cph:(h + 1) * cph] = acc_scr[:, h * cph:(h + 1) * cph] * inv
        out = acc_scr[...] + bias_ref[...]                 # [Ti, D]
        # LayerNorm(D) + ReLU   (dropout = eval-mode identity)
        mean = jnp.mean(out, axis=-1, keepdims=True)
        cen = out - mean
        var = jnp.mean(cen * cen, axis=-1, keepdims=True)
        y = cen * jax.lax.rsqrt(var + LN_EPS)
        y = y * gamma_ref[...] + beta_ref[...]
        out_ref[...] = jnp.maximum(y, 0.0)


# --------------------------------------------------------------------------
# Wrapper
# --------------------------------------------------------------------------
def gatv2_layer_pallas(x, edge_index, params, *, heads, out_channels, tile_n=128):
    n, f_in = x.shape
    cph = out_channels
    d = heads * cph
    tn = tile_n                         # 128 for the demo; 256-512 at production N
    n_pad = ((n + tn - 1) // tn) * tn
    n_tiles = n_pad // tn
    f32 = jnp.float32

    x_p = jnp.zeros((n_pad, f_in), f32).at[:n, :].set(x.astype(f32))
    xT_p = x_p.T

    # dense int8 edge mask (rows = target i, cols = source j), incl. self loops.
    # NOTE: duplicate edges in edge_index are deduplicated by the dense mask.
    mask = jnp.zeros((n_pad, n_pad), jnp.int8)
    mask = mask.at[edge_index[1], edge_index[0]].set(1)
    mask = mask.at[jnp.arange(n), jnp.arange(n)].set(1)

    # fused projection weights / biases
    w_fused = jnp.concatenate([params["wl"], params["wr"]], axis=1)      # [F_in, 2D]
    b_fused = jnp.concatenate([params["bl"], params["br"]], axis=1)      # [1, 2D]
    wlT = params["wl"].T                                                 # [D, F_in]
    blT = params["bl"].T                                                 # [D, 1]

    # block-diagonal attention matrix for the linear (0.6*) part of leaky_relu
    att = params["att"].astype(f32)                                      # [H, C]
    att_bd = jnp.zeros((d, heads), f32)
    for h in range(heads):
        att_bd = att_bd.at[h * cph:(h + 1) * cph, h].set(att[h])
    att_bd_lin = LEAK_LIN * att_bd                                       # [D, H]
    att_bd_linT = att_bd_lin.T                                           # [H, D]
    att_abs = LEAK_ABS * att                                             # [H, C] -> SMEM scalars

    # ---- kernel 1: fused projections --------------------------------------
    xl, xr, xlT, ar, alT = pl.pallas_call(
        functools.partial(_proj_kernel, d=d),
        grid=(n_tiles,),
        in_specs=[
            pl.BlockSpec((tn, f_in), lambda i: (i, 0)),      # x
            pl.BlockSpec((f_in, tn), lambda i: (0, i)),      # x^T
            pl.BlockSpec((f_in, 2 * d), lambda i: (0, 0)),   # [Wl | Wr]
            pl.BlockSpec((1, 2 * d), lambda i: (0, 0)),      # [bl | br]
            pl.BlockSpec((d, f_in), lambda i: (0, 0)),       # Wl^T
            pl.BlockSpec((d, 1), lambda i: (0, 0)),          # bl^T
            pl.BlockSpec((d, heads), lambda i: (0, 0)),      # 0.6*att block-diag
            pl.BlockSpec((heads, d), lambda i: (0, 0)),      # its transpose
        ],
        out_specs=[
            pl.BlockSpec((tn, d), lambda i: (i, 0)),         # x_l
            pl.BlockSpec((tn, d), lambda i: (i, 0)),         # x_r
            pl.BlockSpec((d, tn), lambda i: (0, i)),         # x_l^T
            pl.BlockSpec((tn, heads), lambda i: (i, 0)),     # 0.6*a.x_r
            pl.BlockSpec((heads, tn), lambda i: (0, i)),     # 0.6*a.x_l (transposed)
        ],
        out_shape=[
            jax.ShapeDtypeStruct((n_pad, d), f32),
            jax.ShapeDtypeStruct((n_pad, d), f32),
            jax.ShapeDtypeStruct((d, n_pad), f32),
            jax.ShapeDtypeStruct((n_pad, heads), f32),
            jax.ShapeDtypeStruct((heads, n_pad), f32),
        ],
        compiler_params=pltpu.CompilerParams(
            dimension_semantics=("parallel",),
            vmem_limit_bytes=32 * 1024 * 1024),
    )(x_p, xT_p, w_fused, b_fused, wlT, blT, att_bd_lin, att_bd_linT)

    # ---- kernel 2: tiled attention + online softmax + LayerNorm + ReLU ----
    y = pl.pallas_call(
        functools.partial(_attn_kernel, heads=heads, cph=cph),
        grid=(n_tiles, n_tiles),                             # (targets, sources-last)
        in_specs=[
            pl.BlockSpec(memory_space=pltpu.MemorySpace.SMEM),   # 0.4*att scalars
            pl.BlockSpec((tn, d), lambda i, j: (i, 0)),          # x_r   (targets)
            pl.BlockSpec((d, tn), lambda i, j: (0, j)),          # x_l^T (sources)
            pl.BlockSpec((tn, d), lambda i, j: (j, 0)),          # x_l   (sources)
            pl.BlockSpec((tn, heads), lambda i, j: (i, 0)),      # 0.6*a.x_r
            pl.BlockSpec((heads, tn), lambda i, j: (0, j)),      # 0.6*a.x_l^T
            pl.BlockSpec((tn, tn), lambda i, j: (i, j)),         # int8 edge-mask tile
            pl.BlockSpec((1, d), lambda i, j: (0, 0)),           # conv output bias
            pl.BlockSpec((1, d), lambda i, j: (0, 0)),           # LN gamma
            pl.BlockSpec((1, d), lambda i, j: (0, 0)),           # LN beta
        ],
        out_specs=pl.BlockSpec((tn, d), lambda i, j: (i, 0)),
        out_shape=jax.ShapeDtypeStruct((n_pad, d), f32),
        scratch_shapes=[
            pltpu.VMEM((tn, heads), f32),    # running max  m
            pltpu.VMEM((tn, heads), f32),    # running sum  l
            pltpu.VMEM((tn, d), f32),        # running weighted accumulator
        ],
        compiler_params=pltpu.CompilerParams(
            dimension_semantics=("parallel", "arbitrary"),
            vmem_limit_bytes=32 * 1024 * 1024),
    )(att_abs, xr, xlT, xl, ar, alT, mask,
      params["bias"], params["gamma"], params["beta"])

    return y[:n, :]


# --------------------------------------------------------------------------
# Pure-JAX reference (same math) for validation
# --------------------------------------------------------------------------
def gatv2_layer_ref(x, edge_index, params, *, heads, out_channels):
    n = x.shape[0]
    adj_bias = jnp.full((n, n), NEG_INF, jnp.float32)
    adj_bias = adj_bias.at[edge_index[1], edge_index[0]].set(0.0)
    adj_bias = adj_bias.at[jnp.arange(n), jnp.arange(n)].set(0.0)
    xl = x @ params["wl"] + params["bl"]
    xr = x @ params["wr"] + params["br"]
    outs = []
    for h in range(heads):
        xl_h = xl[:, h * out_channels:(h + 1) * out_channels]
        xr_h = xr[:, h * out_channels:(h + 1) * out_channels]
        s = xr_h[:, None, :] + xl_h[None, :, :]
        s = jnp.where(s > 0, s, NEG_SLOPE * s)
        e = jnp.sum(s * params["att"][h][None, None, :], axis=-1) + adj_bias
        alpha = jax.nn.softmax(e, axis=1)
        outs.append(alpha @ xl_h)
    out = jnp.concatenate(outs, axis=-1) + params["bias"]
    mean = jnp.mean(out, axis=-1, keepdims=True)
    var = jnp.mean((out - mean) ** 2, axis=-1, keepdims=True)
    y = (out - mean) * jax.lax.rsqrt(var + LN_EPS)
    y = y * params["gamma"] + params["beta"]
    return jnp.maximum(y, 0.0)


if __name__ == "__main__":
    N = 200             # nodes (not a tile multiple -> exercises padding path)
    F_IN = 32           # in_channels
    F_OUT = 32          # out_channels (== in_channels so LayerNorm(in*heads) matches concat)
    HEADS = 4
    D = HEADS * F_OUT   # 128 -> lane-dense output stores

    key = jax.random.PRNGKey(0)
    ks = jax.random.split(key, 8)

    x = jax.random.normal(ks[0], (N, F_IN), dtype=jnp.float32)
    # bidirectional ring + a chord family
    src = jnp.concatenate([jnp.arange(N), (jnp.arange(N) + 1) % N, jnp.arange(N)])
    dst = jnp.concatenate([(jnp.arange(N) + 1) % N, jnp.arange(N), (jnp.arange(N) + 7) % N])
    edge_index = jnp.stack([src, dst]).astype(jnp.int32)      # [2, E], row0=src, row1=dst

    glorot = lambda k, shape: (jax.random.normal(k, shape, jnp.float32)
                               * jnp.sqrt(2.0 / (shape[0] + shape[-1])))
    params = {
        "wl":    glorot(ks[1], (F_IN, D)),                    # lin_l weight [in, out]
        "bl":    0.01 * jax.random.normal(ks[2], (1, D), jnp.float32),
        "wr":    glorot(ks[3], (F_IN, D)),                    # lin_r weight
        "br":    0.01 * jax.random.normal(ks[4], (1, D), jnp.float32),
        "att":   glorot(ks[5], (HEADS, F_OUT)),               # attention vector per head
        "bias":  0.01 * jax.random.normal(ks[6], (1, D), jnp.float32),
        "gamma": jnp.ones((1, D), jnp.float32),               # LayerNorm weight
        "beta":  jnp.zeros((1, D), jnp.float32),              # LayerNorm bias
    }

    out = gatv2_layer_pallas(x, edge_index, params, heads=HEADS, out_channels=F_OUT)
    out = jax.block_until_ready(out)

    ref = gatv2_layer_ref(x, edge_index, params, heads=HEADS, out_channels=F_OUT)
    # tolerance covers the EUP approx-reciprocal softmax normalization
    np.testing.assert_allclose(np.asarray(out), np.asarray(ref), rtol=1e-2, atol=1e-2)

    print("KERNEL_OK")
</pallas_src>

<mosaic_0001>
module attributes {stable_mosaic.version = 11 : i64} {
  func.func @_proj_kernel(%arg0: i32, %arg1: memref<128x32xf32, #tpu.memory_space<vmem>>, %arg2: memref<32x128xf32, #tpu.memory_space<vmem>>, %arg3: memref<32x256xf32, #tpu.memory_space<vmem>>, %arg4: memref<1x256xf32, #tpu.memory_space<vmem>>, %arg5: memref<128x32xf32, #tpu.memory_space<vmem>>, %arg6: memref<128x1xf32, #tpu.memory_space<vmem>>, %arg7: memref<128x4xf32, #tpu.memory_space<vmem>>, %arg8: memref<4x128xf32, #tpu.memory_space<vmem>>, %arg9: memref<128x128xf32, #tpu.memory_space<vmem>>, %arg10: memref<128x128xf32, #tpu.memory_space<vmem>>, %arg11: memref<128x128xf32, #tpu.memory_space<vmem>>, %arg12: memref<128x4xf32, #tpu.memory_space<vmem>>, %arg13: memref<4x128xf32, #tpu.memory_space<vmem>>) attributes {dimension_semantics = [#tpu.dimension_semantics<parallel>], iteration_bounds = array<i64: 2>, scalar_prefetch = 0 : i64, scratch_operands = 0 : i64, tpu.core_type = #tpu.core_type<tc>, window_params = [{transform_indices = @transform_0, window_bounds = array<i64: 128, 32>}, {transform_indices = @transform_1, window_bounds = array<i64: 32, 128>}, {pipeline_mode = #tpu.pipeline_mode<synchronous>, transform_indices = @transform_2, window_bounds = array<i64: 32, 256>}, {pipeline_mode = #tpu.pipeline_mode<synchronous>, transform_indices = @transform_3, window_bounds = array<i64: 1, 256>}, {pipeline_mode = #tpu.pipeline_mode<synchronous>, transform_indices = @transform_4, window_bounds = array<i64: 128, 32>}, {pipeline_mode = #tpu.pipeline_mode<synchronous>, transform_indices = @transform_5, window_bounds = array<i64: 128, 1>}, {pipeline_mode = #tpu.pipeline_mode<synchronous>, transform_indices = @transform_6, window_bounds = array<i64: 128, 4>}, {pipeline_mode = #tpu.pipeline_mode<synchronous>, transform_indices = @transform_7, window_bounds = array<i64: 4, 128>}, {transform_indices = @transform_8, window_bounds = array<i64: 128, 128>}, {transform_indices = @transform_9, window_bounds = array<i64: 128, 128>}, {transform_indices = @transform_10, window_bounds = array<i64: 128, 128>}, {transform_indices = @transform_11, window_bounds = array<i64: 128, 4>}, {transform_indices = @transform_12, window_bounds = array<i64: 4, 128>}]} {
    %c0 = arith.constant 0 : index
    %c0_0 = arith.constant 0 : index
    %0 = vector.load %arg1[%c0, %c0_0] : memref<128x32xf32, #tpu.memory_space<vmem>>, vector<128x32xf32>
    %c0_1 = arith.constant 0 : index
    %c0_2 = arith.constant 0 : index
    %1 = vector.load %arg3[%c0_1, %c0_2] : memref<32x256xf32, #tpu.memory_space<vmem>>, vector<32x256xf32>
    %cst = arith.constant dense<0.000000e+00> : vector<128x256xf32>
    %2 = tpu.matmul %0, %1, %cst {dimension_numbers = #tpu.dot_dimension_numbers<[1], [0], [0], [1], [0, 0, 1, 1], [], []>} : vector<128x32xf32>, vector<32x256xf32>, vector<128x256xf32> -> vector<128x256xf32>
    %c0_3 = arith.constant 0 : index
    %c0_4 = arith.constant 0 : index
    %3 = vector.load %arg4[%c0_3, %c0_4] : memref<1x256xf32, #tpu.memory_space<vmem>>, vector<1x256xf32>
    %4 = vector.broadcast %3 : vector<1x256xf32> to vector<128x256xf32>
    %5 = arith.addf %2, %4 : vector<128x256xf32>
    %6 = vector.extract_strided_slice %5 {offsets = [0, 0], sizes = [128, 128], strides = [1, 1]} : vector<128x256xf32> to vector<128x128xf32>
    %7 = vector.extract_strided_slice %5 {offsets = [0, 128], sizes = [128, 128], strides = [1, 1]} : vector<128x256xf32> to vector<128x128xf32>
    %c0_5 = arith.constant 0 : index
    %c0_6 = arith.constant 0 : index
    %8 = vector.load %arg9[%c0_5, %c0_6] : memref<128x128xf32, #tpu.memory_space<vmem>>, vector<128x128xf32>
    tpu.vector_store %arg9[%c0_5, %c0_6], %6 {strides = array<i32>} : memref<128x128xf32, #tpu.memory_space<vmem>>, vector<128x128xf32>,
    %c0_7 = arith.constant 0 : index
    %c0_8 = arith.constant 0 : index
    %9 = vector.load %arg10[%c0_7, %c0_8] : memref<128x128xf32, #tpu.memory_space<vmem>>, vector<128x128xf32>
    tpu.vector_store %arg10[%c0_7, %c0_8], %7 {strides = array<i32>} : memref<128x128xf32, #tpu.memory_space<vmem>>, vector<128x128xf32>,
    %c0_9 = arith.constant 0 : index
    %c0_10 = arith.constant 0 : index
    %10 = vector.load %arg5[%c0_9, %c0_10] : memref<128x32xf32, #tpu.memory_space<vmem>>, vector<128x32xf32>
    %c0_11 = arith.constant 0 : index
    %c0_12 = arith.constant 0 : index
    %11 = vector.load %arg2[%c0_11, %c0_12] : memref<32x128xf32, #tpu.memory_space<vmem>>, vector<32x128xf32>
    %cst_13 = arith.constant dense<0.000000e+00> : vector<128x128xf32>
    %12 = tpu.matmul %10, %11, %cst_13 {dimension_numbers = #tpu.dot_dimension_numbers<[1], [0], [0], [1], [0, 0, 1, 1], [], []>} : vector<128x32xf32>, vector<32x128xf32>, vector<128x128xf32> -> vector<128x128xf32>
    %c0_14 = arith.constant 0 : index
    %c0_15 = arith.constant 0 : index
    %13 = vector.load %arg6[%c0_14, %c0_15] : memref<128x1xf32, #tpu.memory_space<vmem>>, vector<128x1xf32>
    %14 = vector.broadcast %13 : vector<128x1xf32> to vector<128x128xf32>
    %15 = arith.addf %12, %14 : vector<128x128xf32>
    %c0_16 = arith.constant 0 : index
    %c0_17 = arith.constant 0 : index
    %16 = vector.load %arg11[%c0_16, %c0_17] : memref<128x128xf32, #tpu.memory_space<vmem>>, vector<128x128xf32>
    tpu.vector_store %arg11[%c0_16, %c0_17], %15 {strides = array<i32>} : memref<128x128xf32, #tpu.memory_space<vmem>>, vector<128x128xf32>,
    %c0_18 = arith.constant 0 : index
    %c0_19 = arith.constant 0 : index
    %17 = vector.load %arg7[%c0_18, %c0_19] : memref<128x4xf32, #tpu.memory_space<vmem>>, vector<128x4xf32>
    %cst_20 = arith.constant dense<0.000000e+00> : vector<128x4xf32>
    %18 = tpu.matmul %7, %17, %cst_20 {dimension_numbers = #tpu.dot_dimension_numbers<[1], [0], [0], [1], [0, 0, 1, 1], [], []>} : vector<128x128xf32>, vector<128x4xf32>, vector<128x4xf32> -> vector<128x4xf32>
    %c0_21 = arith.constant 0 : index
    %c0_22 = arith.constant 0 : index
    %19 = vector.load %arg12[%c0_21, %c0_22] : memref<128x4xf32, #tpu.memory_space<vmem>>, vector<128x4xf32>
    tpu.vector_store %arg12[%c0_21, %c0_22], %18 {strides = array<i32>} : memref<128x4xf32, #tpu.memory_space<vmem>>, vector<128x4xf32>,
    %c0_23 = arith.constant 0 : index
    %c0_24 = arith.constant 0 : index
    %20 = vector.load %arg8[%c0_23, %c0_24] : memref<4x128xf32, #tpu.memory_space<vmem>>, vector<4x128xf32>
    %cst_25 = arith.constant dense<0.000000e+00> : vector<4x128xf32>
    %21 = tpu.matmul %20, %15, %cst_25 {dimension_numbers = #tpu.dot_dimension_numbers<[1], [0], [0], [1], [0, 0, 1, 1], [], []>} : vector<4x128xf32>, vector<128x128xf32>, vector<4x128xf32> -> vector<4x128xf32>
    %c0_26 = arith.constant 0 : index
    %c0_27 = arith.constant 0 : index
    %22 = vector.load %arg13[%c0_26, %c0_27] : memref<4x128xf32, #tpu.memory_space<vmem>>, vector<4x128xf32>
    tpu.vector_store %arg13[%c0_26, %c0_27], %21 {strides = array<i32>} : memref<4x128xf32, #tpu.memory_space<vmem>>, vector<4x128xf32>,
    return
  }
  func.func @transform_0(%arg0: i32) -> (i32, i32) {
    %c0_i32 = arith.constant 0 : i32
    %c0_i32_0 = arith.constant 0 : i32
    return %arg0, %c0_i32 : i32, i32
  }
  func.func @transform_1(%arg0: i32) -> (i32, i32) {
    %c0_i32 = arith.constant 0 : i32
    %c0_i32_0 = arith.constant 0 : i32
    return %c0_i32, %arg0 : i32, i32
  }
  func.func @transform_2(%arg0: i32) -> (i32, i32) {
    %c0_i32 = arith.constant 0 : i32
    %c0_i32_0 = arith.constant 0 : i32
    %c0_i32_1 = arith.constant 0 : i32
    return %c0_i32, %c0_i32_0 : i32, i32
  }
  func.func @transform_3(%arg0: i32) -> (i32, i32) {
    %c0_i32 = arith.constant 0 : i32
    %c0_i32_0 = arith.constant 0 : i32
    %c0_i32_1 = arith.constant 0 : i32
    return %c0_i32, %c0_i32_0 : i32, i32
  }
  func.func @transform_4(%arg0: i32) -> (i32, i32) {
    %c0_i32 = arith.constant 0 : i32
    %c0_i32_0 = arith.constant 0 : i32
    %c0_i32_1 = arith.constant 0 : i32
    return %c0_i32, %c0_i32_0 : i32, i32
  }
  func.func @transform_5(%arg0: i32) -> (i32, i32) {
    %c0_i32 = arith.constant 0 : i32
    %c0_i32_0 = arith.constant 0 : i32
    %c0_i32_1 = arith.constant 0 : i32
    return %c0_i32, %c0_i32_0 : i32, i32
  }
  func.func @transform_6(%arg0: i32) -> (i32, i32) {
    %c0_i32 = arith.constant 0 : i32
    %c0_i32_0 = arith.constant 0 : i32
    %c0_i32_1 = arith.constant 0 : i32
    return %c0_i32, %c0_i32_0 : i32, i32
  }
  func.func @transform_7(%arg0: i32) -> (i32, i32) {
    %c0_i32 = arith.constant 0 : i32
    %c0_i32_0 = arith.constant 0 : i32
    %c0_i32_1 = arith.constant 0 : i32
    return %c0_i32, %c0_i32_0 : i32, i32
  }
  func.func @transform_8(%arg0: i32) -> (i32, i32) {
    %c0_i32 = arith.constant 0 : i32
    %c0_i32_0 = arith.constant 0 : i32
    return %arg0, %c0_i32 : i32, i32
  }
  func.func @transform_9(%arg0: i32) -> (i32, i32) {
    %c0_i32 = arith.constant 0 : i32
    %c0_i32_0 = arith.constant 0 : i32
    return %arg0, %c0_i32 : i32, i32
  }
  func.func @transform_10(%arg0: i32) -> (i32, i32) {
    %c0_i32 = arith.constant 0 : i32
    %c0_i32_0 = arith.constant 0 : i32
    return %c0_i32, %arg0 : i32, i32
  }
  func.func @transform_11(%arg0: i32) -> (i32, i32) {
    %c0_i32 = arith.constant 0 : i32
    %c0_i32_0 = arith.constant 0 : i32
    return %arg0, %c0_i32 : i32, i32
  }
  func.func @transform_12(%arg0: i32) -> (i32, i32) {
    %c0_i32 = arith.constant 0 : i32
    %c0_i32_0 = arith.constant 0 : i32
    return %c0_i32, %arg0 : i32, i32
  }
}

</mosaic_0001>

<llo_original>
// kernel: tpu_custom_call.1
$region0: #{tpu_custom_call.1}
  #allocation0 [shape = 'u32[]', space=smem, size = 0x4, offset = 0x4, fixed_abs, tag = 'smem constant byte address 0x4 - core index']
  #allocation1 [shape = 'u32[144,128]{1,0:T(1,128)}', space=vmem, size = 0x12000, scoped, tag = 'internal scratch']
  %s0 = inlined_call_operand.vmem [shape: f32[256,32], index: 0, kind: input, shape index: {}]
  %s1 = inlined_call_operand.vmem [shape: f32[32,256], index: 1, kind: input, shape index: {}]
  %s2 = inlined_call_operand.vmem [shape: f32[32,256], index: 2, kind: input, shape index: {}]
  %s3 = inlined_call_operand.vmem [shape: f32[1,256], index: 3, kind: input, shape index: {}]
  %s4 = inlined_call_operand.vmem [shape: f32[128,32], index: 4, kind: input, shape index: {}]
  %s5 = inlined_call_operand.vmem [shape: f32[128,1], index: 5, kind: input, shape index: {}]
  %s6 = inlined_call_operand.vmem [shape: f32[128,4], index: 6, kind: input, shape index: {}]
  %s7 = inlined_call_operand.vmem [shape: f32[4,128], index: 7, kind: input, shape index: {}]
  %s8 = inlined_call_operand.hbm [shape: f32[256,128], index: 8, kind: output, shape index: {0}]
  %s9 = inlined_call_operand.hbm [shape: f32[256,128], index: 9, kind: output, shape index: {1}]
  %s10 = inlined_call_operand.hbm [shape: f32[128,256], index: 10, kind: output, shape index: {2}]
  %s11 = inlined_call_operand.vmem [shape: f32[256,4], index: 11, kind: output, shape index: {3}]
  %s12 = inlined_call_operand.hbm [shape: f32[4,256], index: 12, kind: output, shape index: {4}]
  %13 = xla_tuple %s8, %s9, %s10, %s11, %s12
  %s14 = sld [smem:[#allocation0]]
  $region135: #{tpu_custom_call.1} parent=0
    _
  %s16 = ssub.s32 1, %s14
  %s17 = scalar_select 0, %s16, %s14
  $region1: #{tpu_custom_call.1} parent=0
    #allocation2 [shape = 'u8[32768]{0}', space=vmem, size = 0x8000, scoped, tag = 'input window, operand 1']
    #allocation3 [shape = 'u8[131072]{0}', space=vmem, size = 0x20000, scoped, tag = 'output window, operand 0']
    #allocation4 [shape = 's32[2]{0}', space=sflag, size = 0x8, scoped, tag = 'scoped memory for tpu_custom_call.1']
    #allocation5 [shape = 'u8[131072]{0}', space=vmem, size = 0x20000, scoped, tag = 'output window, operand 1']
    #allocation6 [shape = 's32[2]{0}', space=sflag, size = 0x8, scoped, tag = 'scoped memory for tpu_custom_call.1']
    #allocation7 [shape = 'u8[131072]{0}', space=vmem, size = 0x20000, scoped, tag = 'output window, operand 2']
    #allocation8 [shape = 'u8[4096]{0}', space=vmem, size = 0x1000, scoped, tag = 'output window, operand 4']
    #allocation9 [shape = 's32[2]{0}', space=sflag, size = 0x8, scoped, tag = 'scoped memory for tpu_custom_call.1']
    %18 = vsyncpa [#allocation4], 0
    %s19 = scalar_lea.sflag [#allocation4], 1
    %20 = vsyncpa %s19, 0
    %21 = vsyncpa [#allocation6], 0
    %s22 = scalar_lea.sflag [#allocation6], 1
    %23 = vsyncpa %s22, 0
    %24 = vsyncpa [#allocation9], 0
    %s25 = scalar_lea.sflag [#allocation9], 1
    %26 = vsyncpa %s25, 0
    loop: start=0, step=1, limit=4
    $region2: #{tpu_custom_call.1} parent=1 // loop_pre_header
      _
    $region3: #{tpu_custom_call.1} parent=1 // loop_header
      %s28 = sphi 0, %s32
      %p29 = scmp.ge.s32.totalorder %s28, 4
      %s38 = sphi 0, %s40
      %s41 = sphi 0, %s38
      %s42 = sphi 0, %s41
      %s58 = sphi 0, %s42
      %s64 = sphi 0, %s66
      %s67 = sphi 0, %s64
      %s68 = sphi 0, %s67
      %s84 = sphi 0, %s68
      %s88 = sphi 0, %s88
      %s90 = sphi 0, %s88
      %s91 = sphi 0, %s90
      %s105 = sphi 0, %s91
      %s109 = sphi 0, %s109
      %s111 = sphi 0, %s109
      %s112 = sphi 0, %s111
      %s126 = sphi 0, %s112
      %s130 = sphi 0, %s130
      %s132 = sphi 0, %s130
      %s133 = sphi 0, %s132
      %s147 = sphi 0, %s133
      %s151 = sphi 0, %s151
      %s153 = sphi 0, %s151
      %s154 = sphi 0, %s153
      %s168 = sphi 0, %s154
      %s172 = sphi 0, %s172
      %s174 = sphi 0, %s172
      %s175 = sphi 0, %s174
      %s189 = sphi 0, %s175
      %s193 = sphi 0, %s193
      %s195 = sphi 0, %s193
      %s196 = sphi 0, %s195
      %s210 = sphi 0, %s196
      %s216 = sphi 0, %s218
      %s219 = sphi 0, %s216
      %s220 = sphi 0, %s219
      %s236 = sphi 0, %s220
      %s242 = sphi 0, %s244
      %s245 = sphi 0, %s242
      %s246 = sphi 0, %s245
      %s262 = sphi 0, %s246
      %s268 = sphi 0, %s270
      %s271 = sphi 0, %s268
      %s272 = sphi 0, %s271
      %s288 = sphi 0, %s272
      %s294 = sphi 0, %s296
      %s297 = sphi 0, %s294
      %s298 = sphi 0, %s297
      %s314 = sphi 0, %s298
      %s320 = sphi 0, %s322
      %s323 = sphi 0, %s320
      %s324 = sphi 0, %s323
      %s340 = sphi 0, %s324
    $region4: #{tpu_custom_call.1} parent=1 // loop_header_branch
      %31 = sbr.rel (%p29) target = $region8
    $region5: #{tpu_custom_call.1} parent=1 // loop_body
      %s33 = ssub.s32 %s28, 1
      %s34 = ssub.s32 %s28, 2
      %s35 = sadd.s32 %s28, 1
      %s36 = ssub.s32 %s28, %s35
      %p37 = scmp.eq.s32.totalorder %s36, 0
      %s39 = sadd.s32 %s38, 1
      %s40 = scalar_select %p37, %s38, %s39
      %p43 = pneg %p37
      %p44 = scmp.eq.s32.totalorder %s28, 1
      %p45 = por %p43, %p44
      %p46 = scmp.ne.s32.totalorder %s38, %s41
      %p47 = scmp.eq.s32.totalorder %s28, 0
      %p48 = por %p46, %p47
      %p49 = scmp.ne.s32.totalorder %s38, %s41
      %p50 = scmp.eq.s32.totalorder %s33, 1
      %p51 = por %p49, %p50
      %p52 = scmp.ne.s32.totalorder %s41, %s42
      %p53 = scmp.eq.s32.totalorder %s33, 0
      %p54 = por %p52, %p53
      %p55 = scmp.ne.s32.totalorder %s41, %s42
      %p56 = scmp.eq.s32.totalorder %s34, 1
      %p57 = por %p55, %p56
      %p59 = scmp.ne.s32.totalorder %s42, %s58
      %p60 = scmp.eq.s32.totalorder %s34, 0
      %p61 = por %p59, %p60
      %s62 = ssub.s32 %s28, %s35
      %p63 = scmp.eq.s32.totalorder %s62, 0
      %s65 = sadd.s32 %s64, 1
      %s66 = scalar_select %p63, %s64, %s65
      %p69 = pneg %p63
      %p70 = scmp.eq.s32.totalorder %s28, 1
      %p71 = por %p69, %p70
      %p72 = scmp.ne.s32.totalorder %s64, %s67
      %p73 = scmp.eq.s32.totalorder %s28, 0
      %p74 = por %p72, %p73
      %p75 = scmp.ne.s32.totalorder %s64, %s67
      %p76 = scmp.eq.s32.totalorder %s33, 1
      %p77 = por %p75, %p76
      %p78 = scmp.ne.s32.totalorder %s67, %s68
      %p79 = scmp.eq.s32.totalorder %s33, 0
      %p80 = por %p78, %p79
      %p81 = scmp.ne.s32.totalorder %s67, %s68
      %p82 = scmp.eq.s32.totalorder %s34, 1
      %p83 = por %p81, %p82
      %p85 = scmp.ne.s32.totalorder %s68, %s84
      %p86 = scmp.eq.s32.totalorder %s34, 0
      %p87 = por %p85, %p86
      %s89 = sadd.s32 %s88, 1
      %p92 = scmp.eq.s32.totalorder %s28, 1
      %p93 = scmp.ne.s32.totalorder %s88, %s90
      %p94 = scmp.eq.s32.totalorder %s28, 0
      %p95 = por %p93, %p94
      %p96 = scmp.ne.s32.totalorder %s88, %s90
      %p97 = scmp.eq.s32.totalorder %s33, 1
      %p98 = por %p96, %p97
      %p99 = scmp.ne.s32.totalorder %s90, %s91
      %p100 = scmp.eq.s32.totalorder %s33, 0
      %p101 = por %p99, %p100
      %p102 = scmp.ne.s32.totalorder %s90, %s91
      %p103 = scmp.eq.s32.totalorder %s34, 1
      %p104 = por %p102, %p103
      %p106 = scmp.ne.s32.totalorder %s91, %s105
      %p107 = scmp.eq.s32.totalorder %s34, 0
      %p108 = por %p106, %p107
      %s110 = sadd.s32 %s109, 1
      %p113 = scmp.eq.s32.totalorder %s28, 1
      %p114 = scmp.ne.s32.totalorder %s109, %s111
      %p115 = scmp.eq.s32.totalorder %s28, 0
      %p116 = por %p114, %p115
      %p117 = scmp.ne.s32.totalorder %s109, %s111
      %p118 = scmp.eq.s32.totalorder %s33, 1
      %p119 = por %p117, %p118
      %p120 = scmp.ne.s32.totalorder %s111, %s112
      %p121 = scmp.eq.s32.totalorder %s33, 0
      %p122 = por %p120, %p121
      %p123 = scmp.ne.s32.totalorder %s111, %s112
      %p124 = scmp.eq.s32.totalorder %s34, 1
      %p125 = por %p123, %p124
      %p127 = scmp.ne.s32.totalorder %s112, %s126
      %p128 = scmp.eq.s32.totalorder %s34, 0
      %p129 = por %p127, %p128
      %s131 = sadd.s32 %s130, 1
      %p134 = scmp.eq.s32.totalorder %s28, 1
      %p135 = scmp.ne.s32.totalorder %s130, %s132
      %p136 = scmp.eq.s32.totalorder %s28, 0
      %p137 = por %p135, %p136
      %p138 = scmp.ne.s32.totalorder %s130, %s132
      %p139 = scmp.eq.s32.totalorder %s33, 1
      %p140 = por %p138, %p139
      %p141 = scmp.ne.s32.totalorder %s132, %s133
      %p142 = scmp.eq.s32.totalorder %s33, 0
      %p143 = por %p141, %p142
      %p144 = scmp.ne.s32.totalorder %s132, %s133
      %p145 = scmp.eq.s32.totalorder %s34, 1
      %p146 = por %p144, %p145
      %p148 = scmp.ne.s32.totalorder %s133, %s147
      %p149 = scmp.eq.s32.totalorder %s34, 0
      %p150 = por %p148, %p149
      %s152 = sadd.s32 %s151, 1
      %p155 = scmp.eq.s32.totalorder %s28, 1
      %p156 = scmp.ne.s32.totalorder %s151, %s153
      %p157 = scmp.eq.s32.totalorder %s28, 0
      %p158 = por %p156, %p157
      %p159 = scmp.ne.s32.totalorder %s151, %s153
      %p160 = scmp.eq.s32.totalorder %s33, 1
      %p161 = por %p159, %p160
      %p162 = scmp.ne.s32.totalorder %s153, %s154
      %p163 = scmp.eq.s32.totalorder %s33, 0
      %p164 = por %p162, %p163
      %p165 = scmp.ne.s32.totalorder %s153, %s154
      %p166 = scmp.eq.s32.totalorder %s34, 1
      %p167 = por %p165, %p166
      %p169 = scmp.ne.s32.totalorder %s154, %s168
      %p170 = scmp.eq.s32.totalorder %s34, 0
      %p171 = por %p169, %p170
      %s173 = sadd.s32 %s172, 1
      %p176 = scmp.eq.s32.totalorder %s28, 1
      %p177 = scmp.ne.s32.totalorder %s172, %s174
      %p178 = scmp.eq.s32.totalorder %s28, 0
      %p179 = por %p177, %p178
      %p180 = scmp.ne.s32.totalorder %s172, %s174
      %p181 = scmp.eq.s32.totalorder %s33, 1
      %p182 = por %p180, %p181
      %p183 = scmp.ne.s32.totalorder %s174, %s175
      %p184 = scmp.eq.s32.totalorder %s33, 0
      %p185 = por %p183, %p184
      %p186 = scmp.ne.s32.totalorder %s174, %s175
      %p187 = scmp.eq.s32.totalorder %s34, 1
      %p188 = por %p186, %p187
      %p190 = scmp.ne.s32.totalorder %s175, %s189
      %p191 = scmp.eq.s32.totalorder %s34, 0
      %p192 = por %p190, %p191
      %s194 = sadd.s32 %s193, 1
      %p197 = scmp.eq.s32.totalorder %s28, 1
      %p198 = scmp.ne.s32.totalorder %s193, %s195
      %p199 = scmp.eq.s32.totalorder %s28, 0
      %p200 = por %p198, %p199
      %p201 = scmp.ne.s32.totalorder %s193, %s195
      %p202 = scmp.eq.s32.totalorder %s33, 1
      %p203 = por %p201, %p202
      %p204 = scmp.ne.s32.totalorder %s195, %s196
      %p205 = scmp.eq.s32.totalorder %s33, 0
      %p206 = por %p204, %p205
      %p207 = scmp.ne.s32.totalorder %s195, %s196
      %p208 = scmp.eq.s32.totalorder %s34, 1
      %p209 = por %p207, %p208
      %p211 = scmp.ne.s32.totalorder %s196, %s210
      %p212 = scmp.eq.s32.totalorder %s34, 0
      %p213 = por %p211, %p212
      %s214 = ssub.s32 %s28, %s35
      %p215 = scmp.eq.s32.totalorder %s214, 0
      %s217 = sadd.s32 %s216, 1
      %s218 = scalar_select %p215, %s216, %s217
      %p221 = pneg %p215
      %p222 = scmp.eq.s32.totalorder %s28, 1
      %p223 = por %p221, %p222
      %p224 = scmp.ne.s32.totalorder %s216, %s219
      %p225 = scmp.eq.s32.totalorder %s28, 0
      %p226 = por %p224, %p225
      %p227 = scmp.ne.s32.totalorder %s216, %s219
      %p228 = scmp.eq.s32.totalorder %s33, 1
      %p229 = por %p227, %p228
      %p230 = scmp.ne.s32.totalorder %s219, %s220
      %p231 = scmp.eq.s32.totalorder %s33, 0
      %p232 = por %p230, %p231
      %p233 = scmp.ne.s32.totalorder %s219, %s220
      %p234 = scmp.eq.s32.totalorder %s34, 1
      %p235 = por %p233, %p234
      %p237 = scmp.ne.s32.totalorder %s220, %s236
      %p238 = scmp.eq.s32.totalorder %s34, 0
      %p239 = por %p237, %p238
      %s240 = ssub.s32 %s28, %s35
      %p241 = scmp.eq.s32.totalorder %s240, 0
      %s243 = sadd.s32 %s242, 1
      %s244 = scalar_select %p241, %s242, %s243
      %p247 = pneg %p241
      %p248 = scmp.eq.s32.totalorder %s28, 1
      %p249 = por %p247, %p248
      %p250 = scmp.ne.s32.totalorder %s242, %s245
      %p251 = scmp.eq.s32.totalorder %s28, 0
      %p252 = por %p250, %p251
      %p253 = scmp.ne.s32.totalorder %s242, %s245
      %p254 = scmp.eq.s32.totalorder %s33, 1
      %p255 = por %p253, %p254
      %p256 = scmp.ne.s32.totalorder %s245, %s246
      %p257 = scmp.eq.s32.totalorder %s33, 0
      %p258 = por %p256, %p257
      %p259 = scmp.ne.s32.totalorder %s245, %s246
      %p260 = scmp.eq.s32.totalorder %s34, 1
      %p261 = por %p259, %p260
      %p263 = scmp.ne.s32.totalorder %s246, %s262
      %p264 = scmp.eq.s32.totalorder %s34, 0
      %p265 = por %p263, %p264
      %s266 = ssub.s32 %s28, %s35
      %p267 = scmp.eq.s32.totalorder %s266, 0
      %s269 = sadd.s32 %s268, 1
      %s270 = scalar_select %p267, %s268, %s269
      %p273 = pneg %p267
      %p274 = scmp.eq.s32.totalorder %s28, 1
      %p275 = por %p273, %p274
      %p276 = scmp.ne.s32.totalorder %s268, %s271
      %p277 = scmp.eq.s32.totalorder %s28, 0
      %p278 = por %p276, %p277
      %p279 = scmp.ne.s32.totalorder %s268, %s271
      %p280 = scmp.eq.s32.totalorder %s33, 1
      %p281 = por %p279, %p280
      %p282 = scmp.ne.s32.totalorder %s271, %s272
      %p283 = scmp.eq.s32.totalorder %s33, 0
      %p284 = por %p282, %p283
      %p285 = scmp.ne.s32.totalorder %s271, %s272
      %p286 = scmp.eq.s32.totalorder %s34, 1
      %p287 = por %p285, %p286
      %p289 = scmp.ne.s32.totalorder %s272, %s288
      %p290 = scmp.eq.s32.totalorder %s34, 0
      %p291 = por %p289, %p290
      %s292 = ssub.s32 %s28, %s35
      %p293 = scmp.eq.s32.totalorder %s292, 0
      %s295 = sadd.s32 %s294, 1
      %s296 = scalar_select %p293, %s294, %s295
      %p299 = pneg %p293
      %p300 = scmp.eq.s32.totalorder %s28, 1
      %p301 = por %p299, %p300
      %p302 = scmp.ne.s32.totalorder %s294, %s297
      %p303 = scmp.eq.s32.totalorder %s28, 0
      %p304 = por %p302, %p303
      %p305 = scmp.ne.s32.totalorder %s294, %s297
      %p306 = scmp.eq.s32.totalorder %s33, 1
      %p307 = por %p305, %p306
      %p308 = scmp.ne.s32.totalorder %s297, %s298
      %p309 = scmp.eq.s32.totalorder %s33, 0
      %p310 = por %p308, %p309
      %p311 = scmp.ne.s32.totalorder %s297, %s298
      %p312 = scmp.eq.s32.totalorder %s34, 1
      %p313 = por %p311, %p312
      %p315 = scmp.ne.s32.totalorder %s298, %s314
      %p316 = scmp.eq.s32.totalorder %s34, 0
      %p317 = por %p315, %p316
      %s318 = ssub.s32 %s28, %s35
      %p319 = scmp.eq.s32.totalorder %s318, 0
      %s321 = sadd.s32 %s320, 1
      %s322 = scalar_select %p319, %s320, %s321
      %p325 = pneg %p319
      %p326 = scmp.eq.s32.totalorder %s28, 1
      %p327 = por %p325, %p326
      %p328 = scmp.ne.s32.totalorder %s320, %s323
      %p329 = scmp.eq.s32.totalorder %s28, 0
      %p330 = por %p328, %p329
      %p331 = scmp.ne.s32.totalorder %s320, %s323
      %p332 = scmp.eq.s32.totalorder %s33, 1
      %p333 = por %p331, %p332
      %p334 = scmp.ne.s32.totalorder %s323, %s324
      %p335 = scmp.eq.s32.totalorder %s33, 0
      %p336 = por %p334, %p335
      %p337 = scmp.ne.s32.totalorder %s323, %s324
      %p338 = scmp.eq.s32.totalorder %s34, 1
      %p339 = por %p337, %p338
      %p341 = scmp.ne.s32.totalorder %s324, %s340
      %p342 = scmp.eq.s32.totalorder %s34, 0
      %p343 = por %p341, %p342
      %p344 = scmp.le.s32.totalorder 1, %s28
      %p345 = scmp.lt.s32.totalorder %s28, 3
      %p346 = pnand %p344, %p345
      %p347 = pneg %p346
      // Predicated region
      $region9: #{tpu_custom_call.1} parent=5 // pred_check
        _
      $region10: #{tpu_custom_call.1} parent=5 // pred_check_branch
        %349 = sbr.rel (%p346) target = $region12
      $region11: #{tpu_custom_call.1} parent=5 // pred_region
        %s350 = ssub.s32 %s28, 1
        // Predicated region
        $region13: #{tpu_custom_call.1} parent=11 // pred_check
          %p351 = pneg %p101
        $region14: #{tpu_custom_call.1} parent=11 // pred_check_branch
          %353 = sbr.rel (%p351) target = $region16
        $region15: #{tpu_custom_call.1} parent=11 // pred_region
          _
        $region16: #{tpu_custom_call.1} parent=11 // pred_fallthru
          _
        // Predicated region
        $region17: #{tpu_custom_call.1} parent=11 // pred_check
          %p354 = pneg %p122
        $region18: #{tpu_custom_call.1} parent=11 // pred_check_branch
          %356 = sbr.rel (%p354) target = $region20
        $region19: #{tpu_custom_call.1} parent=11 // pred_region
          _
        $region20: #{tpu_custom_call.1} parent=11 // pred_fallthru
          _
        // Predicated region
        $region21: #{tpu_custom_call.1} parent=11 // pred_check
          %p357 = pneg %p143
        $region22: #{tpu_custom_call.1} parent=11 // pred_check_branch
          %359 = sbr.rel (%p357) target = $region24
        $region23: #{tpu_custom_call.1} parent=11 // pred_region
          _
        $region24: #{tpu_custom_call.1} parent=11 // pred_fallthru
          _
        // Predicated region
        $region25: #{tpu_custom_call.1} parent=11 // pred_check
          %p360 = pneg %p164
        $region26: #{tpu_custom_call.1} parent=11 // pred_check_branch
          %362 = sbr.rel (%p360) target = $region28
        $region27: #{tpu_custom_call.1} parent=11 // pred_region
          _
        $region28: #{tpu_custom_call.1} parent=11 // pred_fallthru
          _
        // Predicated region
        $region29: #{tpu_custom_call.1} parent=11 // pred_check
          %p363 = pneg %p185
        $region30: #{tpu_custom_call.1} parent=11 // pred_check_branch
          %365 = sbr.rel (%p363) target = $region32
        $region31: #{tpu_custom_call.1} parent=11 // pred_region
          _
        $region32: #{tpu_custom_call.1} parent=11 // pred_fallthru
          _
        // Predicated region
        $region33: #{tpu_custom_call.1} parent=11 // pred_check
          %p366 = pneg %p206
        $region34: #{tpu_custom_call.1} parent=11 // pred_check_branch
          %368 = sbr.rel (%p366) target = $region36
        $region35: #{tpu_custom_call.1} parent=11 // pred_region
          _
        $region36: #{tpu_custom_call.1} parent=11 // pred_fallthru
          _
      $region12: #{tpu_custom_call.1} parent=5 // pred_fallthru
        _
      %p369 = scmp.lt.s32.totalorder %s28, 2
      // Predicated region
      $region37: #{tpu_custom_call.1} parent=5 // pred_check
        %p370 = pneg %p369
      $region38: #{tpu_custom_call.1} parent=5 // pred_check_branch
        %372 = sbr.rel (%p370) target = $region40
      $region39: #{tpu_custom_call.1} parent=5 // pred_region
        // Predicated region
        $region41: #{tpu_custom_call.1} parent=39 // pred_check
          %p373 = pneg %p48
        $region42: #{tpu_custom_call.1} parent=39 // pred_check_branch
          %375 = sbr.rel (%p373) target = $region44
        $region43: #{tpu_custom_call.1} parent=39 // pred_region
          %s376 = smul.u32 16, %s28
          %p377 = scmp.lt.s32.totalorder %s376, 31
          %s378 = scalar_select %p377, %s376, 31
          %s379 = smul.addr %s378, 8
          %s380 = scalar_lea.vmem %s0, %s379
          %s381 = smul.u32 16, %s28
        $region44: #{tpu_custom_call.1} parent=39 // pred_fallthru
          _
        // Predicated region
        $region45: #{tpu_custom_call.1} parent=39 // pred_check
          %p382 = pneg %p74
        $region46: #{tpu_custom_call.1} parent=39 // pred_check_branch
          %384 = sbr.rel (%p382) target = $region48
        $region47: #{tpu_custom_call.1} parent=39 // pred_region
          %s385 = sand.u32 %s64, 1
          %s386 = sand.u32 %s64, 1
          %s387 = smul.addr %s386, 32
          %s388 = scalar_lea.vmem [#allocation2], %s387
          %s389 = smul.addr %s28, 8
          %s390 = scalar_lea.vmem %s1, %s389
          // Predicated region
          $region49: #{tpu_custom_call.1} parent=47 // pred_check
            _
          $region50: #{tpu_custom_call.1} parent=47 // pred_check_branch
            %392 = sbr.rel (0) target = $region52
          $region51: #{tpu_custom_call.1} parent=47 // pred_region
            // Predicated region
            $region53: #{tpu_custom_call.1} parent=51 // pred_check
              _
            $region54: #{tpu_custom_call.1} parent=51 // pred_check_branch
              %394 = sbr.rel (0) target = $region56
            $region55: #{tpu_custom_call.1} parent=51 // pred_region
              // Predicated region
              $region68: #{tpu_custom_call.1} parent=55 // pred_check
                _
              $region69: #{tpu_custom_call.1} parent=55 // pred_check_branch
                %415 = sbr.rel (0) target = $region71
              $region70: #{tpu_custom_call.1} parent=55 // pred_region
                loop: start=0, step=1, limit=1
                $region72: #{tpu_custom_call.1} parent=70 // loop_pre_header
                  _
                $region73: #{tpu_custom_call.1} parent=70 // loop_header
                  %s417 = sphi 0, %s421
                  %p418 = scmp.ge.s32.totalorder %s417, 1
                  %s422 = sphi %s390, %s390
                  %s423 = sphi %s388, %s388
                $region74: #{tpu_custom_call.1} parent=70 // loop_header_branch
                  %420 = sbr.rel (%p418) target = $region78
                $region75: #{tpu_custom_call.1} parent=70 // loop_body
                  %v424 = vld [vmem:[%s422] sm:$0xff]
                  %425 = vst [vmem:[%s423] sm:$0xff] %v424
                  %v426 = vld [vmem:[%s422 + $0x10] sm:$0xff]
                  %427 = vst [vmem:[%s423 + $0x8] sm:$0xff] %v426
                  %v428 = vld [vmem:[%s422 + $0x20] sm:$0xff]
                  %429 = vst [vmem:[%s423 + $0x10] sm:$0xff] %v428
                  %v430 = vld [vmem:[%s422 + $0x30] sm:$0xff]
                  %431 = vst [vmem:[%s423 + $0x18] sm:$0xff] %v430
                $region76: #{tpu_custom_call.1} parent=70 // loop_footer
                  %s421 = sadd.s32 1, %s417
                $region77: #{tpu_custom_call.1} parent=70 // loop_footer_branch
                  %416 = sbr.rel target = $region73
                $region78: #{tpu_custom_call.1} parent=70 // loop_exit
                  _
              $region71: #{tpu_custom_call.1} parent=55 // pred_fallthru
                _
              // Predicated region
              $region79: #{tpu_custom_call.1} parent=55 // pred_check
                _
              $region80: #{tpu_custom_call.1} parent=55 // pred_check_branch
                %433 = sbr.rel target = $region82
              $region81: #{tpu_custom_call.1} parent=55 // pred_region
                _
              $region82: #{tpu_custom_call.1} parent=55 // pred_fallthru
                _
            $region56: #{tpu_custom_call.1} parent=51 // pred_fallthru
              _
            // Predicated region
            $region57: #{tpu_custom_call.1} parent=51 // pred_check
              _
            $region58: #{tpu_custom_call.1} parent=51 // pred_check_branch
              %396 = sbr.rel target = $region60
            $region59: #{tpu_custom_call.1} parent=51 // pred_region
              loop: start=0, step=1, limit=1
              $region61: #{tpu_custom_call.1} parent=59 // loop_pre_header
                _
              $region62: #{tpu_custom_call.1} parent=59 // loop_header
                %s399 = sphi 0, %s403
                %p400 = scmp.ge.s32.totalorder %s399, 1
                %s404 = sphi %s390, %s390
                %s405 = sphi %s388, %s388
              $region63: #{tpu_custom_call.1} parent=59 // loop_header_branch
                %402 = sbr.rel (%p400) target = $region67
              $region64: #{tpu_custom_call.1} parent=59 // loop_body
                %v406 = vld [vmem:[%s404] sm:$0xff]
                %407 = vst [vmem:[%s405] sm:$0xff] %v406
                %v408 = vld [vmem:[%s404 + $0x10] sm:$0xff]
                %409 = vst [vmem:[%s405 + $0x8] sm:$0xff] %v408
                %v410 = vld [vmem:[%s404 + $0x20] sm:$0xff]
                %411 = vst [vmem:[%s405 + $0x10] sm:$0xff] %v410
                %v412 = vld [vmem:[%s404 + $0x30] sm:$0xff]
                %413 = vst [vmem:[%s405 + $0x18] sm:$0xff] %v412
              $region65: #{tpu_custom_call.1} parent=59 // loop_footer
                %s403 = sadd.s32 1, %s399
              $region66: #{tpu_custom_call.1} parent=59 // loop_footer_branch
                %398 = sbr.rel target = $region62
              $region67: #{tpu_custom_call.1} parent=59 // loop_exit
                _
            $region60: #{tpu_custom_call.1} parent=51 // pred_fallthru
              _
          $region52: #{tpu_custom_call.1} parent=47 // pred_fallthru
            _
          %434 = vnop
        $region48: #{tpu_custom_call.1} parent=39 // pred_fallthru
          _
      $region40: #{tpu_custom_call.1} parent=5 // pred_fallthru
        _
      %p435 = scmp.le.s32.totalorder 1, %s28
      %p436 = scmp.lt.s32.totalorder %s28, 3
      %p437 = pnand %p435, %p436
      %p438 = pneg %p437
      // Predicated region
      $region83: #{tpu_custom_call.1} parent=5 // pred_check
        _
      $region84: #{tpu_custom_call.1} parent=5 // pred_check_branch
        %440 = sbr.rel (%p437) target = $region86
      $region85: #{tpu_custom_call.1} parent=5 // pred_region
        %s441 = ssub.s32 %s28, 1
        %s442 = sand.u32 %s67, 1
        %s443 = sand.u32 %s67, 1
        %s444 = smul.addr %s443, 32
        %s445 = scalar_lea.vmem [#allocation2], %s444
        // Predicated region
        $region87: #{tpu_custom_call.1} parent=85 // pred_check
          %p446 = pneg %p80
        $region88: #{tpu_custom_call.1} parent=85 // pred_check_branch
          %448 = sbr.rel (%p446) target = $region90
        $region89: #{tpu_custom_call.1} parent=85 // pred_region
          _
        $region90: #{tpu_custom_call.1} parent=85 // pred_fallthru
          _
        %s449 = smul.u32 16, %s33
        %p450 = scmp.lt.s32.totalorder %s449, 31
        %s451 = scalar_select %p450, %s449, 31
        %s452 = smul.addr %s451, 8
        %s453 = scalar_lea.vmem %s0, %s452
        %p454 = pneg %p54
        %p455 = pneg %p51
        %s456 = sand.u32 %s67, 1
        %s457 = sand.u32 %s67, 1
        %s458 = smul.addr %s457, 32
        %s459 = scalar_lea.vmem [#allocation2], %s458
        %p460 = pneg %p80
        %p461 = pneg %p77
        %p462 = pneg %p101
        %p463 = pneg %p98
        %p464 = pneg %p122
        %p465 = pneg %p119
        %p466 = pneg %p143
        %p467 = pneg %p140
        %p468 = pneg %p164
        %p469 = pneg %p161
        %p470 = pneg %p185
        %p471 = pneg %p182
        %p472 = pneg %p206
        %p473 = pneg %p203
        %p474 = pneg %p232
        %p475 = pneg %p229
        %s476 = sand.u32 %s219, 1
        %s477 = scalar_lea.sflag [#allocation4], %s476
        %s478 = sand.u32 %s219, 1
        %s479 = smul.addr %s478, 128
        %s480 = scalar_lea.vmem [#allocation3], %s479
        %p481 = pneg %p258
        %p482 = pneg %p255
        %s483 = sand.u32 %s33, 1
        %s484 = scalar_lea.sflag [#allocation6], %s483
        %s485 = sand.u32 %s245, 1
        %s486 = smul.addr %s485, 128
        %s487 = scalar_lea.vmem [#allocation5], %s486
        %p488 = pneg %p284
        %p489 = pneg %p281
        %s490 = sand.u32 %s33, 1
        %s491 = scalar_lea.sflag [#allocation6], %s490
        %s492 = sand.u32 %s271, 1
        %s493 = smul.addr %s492, 128
        %s494 = scalar_lea.vmem [#allocation7], %s493
        %p495 = pneg %p310
        %p496 = pneg %p307
        %s497 = smul.u32 16, %s33
        %p498 = scmp.lt.s32.totalorder %s497, 31
        %s499 = scalar_select %p498, %s497, 31
        %s500 = smul.addr %s499, 8
        %s501 = scalar_lea.vmem %s11, %s500
        %p502 = pneg %p336
        %p503 = pneg %p333
        %s504 = sand.u32 %s323, 1
        %s505 = scalar_lea.sflag [#allocation9], %s504
        %s506 = sand.u32 %s323, 1
        %s507 = smul.addr %s506, 4
        %s508 = scalar_lea.vmem [#allocation8], %s507
        %s509 = smul.u32 16, %s33
        %p510 = scmp.lt.s32.totalorder %s509, 31
        %s511 = scalar_select %p510, %s509, 31
        %s512 = smul.addr %s511, 8
        %s513 = scalar_lea.vmem %s0, %s512
        %s514 = smul.u32 16, %s33
        %s515 = smul.u32 16, %s33
        %s516 = smul.u32 16, %s33
        %s517 = smul.u32 16, %s33
        %p518 = scmp.lt.s32.totalorder %s517, 31
        %s519 = scalar_select %p518, %s517, 31
        %s520 = smul.addr %s519, 8
        %s521 = scalar_lea.vmem %s11, %s520
        %s522 = smul.u32 16, %s33
        %v523 = vld [vmem:[%s513] sm:$0xff]
        %v524 = vld [vmem:[%s513 + $0x8] sm:$0xff]
        %v525 = vld [vmem:[%s513 + $0x10] sm:$0xff]
        %v526 = vld [vmem:[%s513 + $0x18] sm:$0xff]
        %v527 = vld [vmem:[%s513 + $0x20] sm:$0xff]
        %v528 = vld [vmem:[%s513 + $0x28] sm:$0xff]
        %v529 = vld [vmem:[%s513 + $0x30] sm:$0xff]
        %v530 = vld [vmem:[%s513 + $0x38] sm:$0xff]
        %v531 = vld [vmem:[%s513 + $0x40] sm:$0xff]
        %v532 = vld [vmem:[%s513 + $0x48] sm:$0xff]
        %v533 = vld [vmem:[%s513 + $0x50] sm:$0xff]
        %v534 = vld [vmem:[%s513 + $0x58] sm:$0xff]
        %v535 = vld [vmem:[%s513 + $0x60] sm:$0xff]
        %v536 = vld [vmem:[%s513 + $0x68] sm:$0xff]
        %v537 = vld [vmem:[%s513 + $0x70] sm:$0xff]
        %v538 = vld [vmem:[%s513 + $0x78] sm:$0xff]
        %v539 = vld [vmem:[%s2] sm:$0xff]
        %v540 = vld [vmem:[%s2 + $0x8] sm:$0xff]
        %v541 = vld [vmem:[%s2 + $0x10] sm:$0xff]
        %v542 = vld [vmem:[%s2 + $0x18] sm:$0xff]
        %v543 = vld [vmem:[%s2 + $0x20] sm:$0xff]
        %v544 = vld [vmem:[%s2 + $0x28] sm:$0xff]
        %v545 = vld [vmem:[%s2 + $0x30] sm:$0xff]
        %v546 = vld [vmem:[%s2 + $0x38] sm:$0xff]
        %v547 = vld [vmem:[%s3] sm:$0x3]
        %v549 = vlaneseq
        %v550 = vshrl.u32 %v549, 7
        %v551 = vsub.s32 0, %v550
        %v552 = vrot.slane %v547, %v551
        %v553 = vlaneseq
        %v554 = vshrl.u32 %v553, 7
        %v555 = vsub.s32 1, %v554
        %v556 = vrot.slane %v547, %v555
        %vm559 = vcmask 261120
        %v561 = vsel %vm559, %v523, 0
        %v564 = vsel %vm559, %v524, 0
        %v567 = vsel %vm559, %v525, 0
        %v570 = vsel %vm559, %v526, 0
        %v573 = vsel %vm559, %v527, 0
        %v576 = vsel %vm559, %v528, 0
        %v579 = vsel %vm559, %v529, 0
        %v582 = vsel %vm559, %v530, 0
        %v585 = vsel %vm559, %v531, 0
        %v588 = vsel %vm559, %v532, 0
        %v591 = vsel %vm559, %v533, 0
        %v594 = vsel %vm559, %v534, 0
        %v597 = vsel %vm559, %v535, 0
        %v600 = vsel %vm559, %v536, 0
        %v603 = vsel %vm559, %v537, 0
        %v606 = vsel %vm559, %v538, 0
        %608 = vmatprep.subr.mxu0 %v540
        %609 = vmatpush1.msra.mxu0 %v539
        %610 = vmatprep.subr.mxu0 %v542
        %611 = vmatpush1.msra.mxu0 %v541
        %612 = vmatprep.subr.mxu0 %v544
        %613 = vmatpush1.msra.mxu0 %v543
        %614 = vmatprep.subr.mxu0 %v546
        %615 = vmatpush1.msra.mxu0 %v545
        %616 = vmatprep.subr.mxu0 0.0
        %617 = vmatpush1.msra.mxu0 0.0
        %618 = vmatprep.subr.mxu0 0.0
        %619 = vmatpush1.msra.mxu0 0.0
        %620 = vmatprep.subr.mxu0 0.0
        %621 = vmatpush1.msra.mxu0 0.0
        %622 = vmatprep.subr.mxu0 0.0
        %623 = vmatpush1.msra.mxu0 0.0
        %624 = vmatprep.subr.mxu0 0.0
        %625 = vmatpush1.msra.mxu0 0.0
        %626 = vmatprep.subr.mxu0 0.0
        %627 = vmatpush1.msra.mxu0 0.0
        %628 = vmatprep.subr.mxu0 0.0
        %629 = vmatpush1.msra.mxu0 0.0
        %630 = vmatprep.subr.mxu0 0.0
        %631 = vmatpush1.msra.mxu0 0.0
        %632 = vmatprep.subr.mxu0 0.0
        %633 = vmatpush1.msra.mxu0 0.0
        %634 = vmatprep.subr.mxu0 0.0
        %635 = vmatpush1.msra.mxu0 0.0
        %636 = vmatprep.subr.mxu0 0.0
        %637 = vmatpush1.msra.mxu0 0.0
        %638 = vmatprep.subr.mxu0 0.0
        %639 = vmatpush1.msra.mxu0 0.0
        %640 = vmatprep.subr.mxu0 0.0
        %641 = vmatpush1.msra.mxu0 0.0
        %642 = vmatprep.subr.mxu0 0.0
        %643 = vmatpush1.msra.mxu0 0.0
        %644 = vmatprep.subr.mxu0 0.0
        %645 = vmatpush1.msra.mxu0 0.0
        %646 = vmatprep.subr.mxu0 0.0
        %647 = vmatpush1.msra.mxu0 0.0
        %648 = vmatprep.subr.mxu0 0.0
        %649 = vmatpush1.msra.mxu0 0.0
        %650 = vmatprep.subr.mxu0 0.0
        %651 = vmatpush1.msra.mxu0 0.0
        %652 = vmatprep.subr.mxu0 0.0
        %653 = vmatpush1.msra.mxu0 0.0
        %654 = vmatprep.subr.mxu0 0.0
        %655 = vmatpush1.msra.mxu0 0.0
        %656 = vmatprep.subr.mxu0 0.0
        %657 = vmatpush1.msra.mxu0 0.0
        %658 = vmatprep.subr.mxu0 0.0
        %659 = vmatpush1.msra.mxu0 0.0
        %660 = vmatprep.subr.mxu0 0.0
        %661 = vmatpush1.msra.mxu0 0.0
        %662 = vmatprep.subr.mxu0 0.0
        %663 = vmatpush1.msra.mxu0 0.0
        %664 = vmatprep.subr.mxu0 0.0
        %665 = vmatpush1.msra.mxu0 0.0
        %666 = vmatprep.subr.mxu0 0.0
        %667 = vmatpush1.msra.mxu0 0.0
        %668 = vmatprep.subr.mxu0 0.0
        %669 = vmatpush1.msra.mxu0 0.0
        %670 = vmatprep.subr.mxu0 0.0
        %671 = vmatpush1.msra.mxu0 0.0
        %672 = vmatprep.mubr.f32.mxu0 0.0
        %673 = vmatmul.mubr.f32.gmra.mrb[0].mxu0 %v561
        %v674 = vpop.f32.mrb[0].mxu0
        %v675 = vadd.f32 %v552, %v674
        %v676 = vpop.f32.mrb[0].mxu0
        %v677 = vadd.f32 %v556, %v676
        %678 = vmatprep.mubr.f32.mxu0 0.0
        %679 = vmatmul.mubr.f32.gmra.mrb[0].mxu0 %v564
        %v680 = vpop.f32.mrb[0].mxu0
        %v681 = vadd.f32 %v552, %v680
        %v682 = vpop.f32.mrb[0].mxu0
        %v683 = vadd.f32 %v556, %v682
        %684 = vmatprep.mubr.f32.mxu0 0.0
        %685 = vmatmul.mubr.f32.gmra.mrb[0].mxu0 %v567
        %v686 = vpop.f32.mrb[0].mxu0
        %v687 = vadd.f32 %v552, %v686
        %v688 = vpop.f32.mrb[0].mxu0
        %v689 = vadd.f32 %v556, %v688
        %690 = vmatprep.mubr.f32.mxu0 0.0
        %691 = vmatmul.mubr.f32.gmra.mrb[0].mxu0 %v570
        %v692 = vpop.f32.mrb[0].mxu0
        %v693 = vadd.f32 %v552, %v692
        %v694 = vpop.f32.mrb[0].mxu0
        %v695 = vadd.f32 %v556, %v694
        %696 = vmatprep.mubr.f32.mxu0 0.0
        %697 = vmatmul.mubr.f32.gmra.mrb[0].mxu0 %v573
        %v698 = vpop.f32.mrb[0].mxu0
        %v699 = vadd.f32 %v552, %v698
        %v700 = vpop.f32.mrb[0].mxu0
        %v701 = vadd.f32 %v556, %v700
        %702 = vmatprep.mubr.f32.mxu0 0.0
        %703 = vmatmul.mubr.f32.gmra.mrb[0].mxu0 %v576
        %v704 = vpop.f32.mrb[0].mxu0
        %v705 = vadd.f32 %v552, %v704
        %v706 = vpop.f32.mrb[0].mxu0
        %v707 = vadd.f32 %v556, %v706
        %708 = vmatprep.mubr.f32.mxu0 0.0
        %709 = vmatmul.mubr.f32.gmra.mrb[0].mxu0 %v579
        %v710 = vpop.f32.mrb[0].mxu0
        %v711 = vadd.f32 %v552, %v710
        %v712 = vpop.f32.mrb[0].mxu0
        %v713 = vadd.f32 %v556, %v712
        %714 = vmatprep.mubr.f32.mxu0 0.0
        %715 = vmatmul.mubr.f32.gmra.mrb[0].mxu0 %v582
        %v716 = vpop.f32.mrb[0].mxu0
        %v717 = vadd.f32 %v552, %v716
        %v718 = vpop.f32.mrb[0].mxu0
        %v719 = vadd.f32 %v556, %v718
        %720 = vmatprep.mubr.f32.mxu0 0.0
        %721 = vmatmul.mubr.f32.gmra.mrb[0].mxu0 %v585
        %v722 = vpop.f32.mrb[0].mxu0
        %v723 = vadd.f32 %v552, %v722
        %v724 = vpop.f32.mrb[0].mxu0
        %v725 = vadd.f32 %v556, %v724
        %726 = vmatprep.mubr.f32.mxu0 0.0
        %727 = vmatmul.mubr.f32.gmra.mrb[0].mxu0 %v588
        %v728 = vpop.f32.mrb[0].mxu0
        %v729 = vadd.f32 %v552, %v728
        %v730 = vpop.f32.mrb[0].mxu0
        %v731 = vadd.f32 %v556, %v730
        %732 = vmatprep.mubr.f32.mxu0 0.0
        %733 = vmatmul.mubr.f32.gmra.mrb[0].mxu0 %v591
        %v734 = vpop.f32.mrb[0].mxu0
        %v735 = vadd.f32 %v552, %v734
        %v736 = vpop.f32.mrb[0].mxu0
        %v737 = vadd.f32 %v556, %v736
        %738 = vmatprep.mubr.f32.mxu0 0.0
        %739 = vmatmul.mubr.f32.gmra.mrb[0].mxu0 %v594
        %v740 = vpop.f32.mrb[0].mxu0
        %v741 = vadd.f32 %v552, %v740
        %v742 = vpop.f32.mrb[0].mxu0
        %v743 = vadd.f32 %v556, %v742
        %744 = vmatprep.mubr.f32.mxu0 0.0
        %745 = vmatmul.mubr.f32.gmra.mrb[0].mxu0 %v597
        %v746 = vpop.f32.mrb[0].mxu0
        %v747 = vadd.f32 %v552, %v746
        %v748 = vpop.f32.mrb[0].mxu0
        %v749 = vadd.f32 %v556, %v748
        %750 = vmatprep.mubr.f32.mxu0 0.0
        %751 = vmatmul.mubr.f32.gmra.mrb[0].mxu0 %v600
        %v752 = vpop.f32.mrb[0].mxu0
        %v753 = vadd.f32 %v552, %v752
        %v754 = vpop.f32.mrb[0].mxu0
        %v755 = vadd.f32 %v556, %v754
        %756 = vmatprep.mubr.f32.mxu0 0.0
        %757 = vmatmul.mubr.f32.gmra.mrb[0].mxu0 %v603
        %v758 = vpop.f32.mrb[0].mxu0
        %v759 = vadd.f32 %v552, %v758
        %v760 = vpop.f32.mrb[0].mxu0
        %v761 = vadd.f32 %v556, %v760
        %762 = vmatprep.mubr.f32.mxu0 0.0
        %763 = vmatmul.mubr.f32.gmra.mrb[0].mxu0 %v606
        %v764 = vpop.f32.mrb[0].mxu0
        %v765 = vadd.f32 %v552, %v764
        %v766 = vpop.f32.mrb[0].mxu0
        %v767 = vadd.f32 %v556, %v766
        %768 = vdwg.mxu0
        %769 = vst [vmem:[%s480] sm:$0xff] %v675
        %770 = vst [vmem:[%s480 + $0x8] sm:$0xff] %v681
        %771 = vst [vmem:[%s480 + $0x10] sm:$0xff] %v687
        %772 = vst [vmem:[%s480 + $0x18] sm:$0xff] %v693
        %773 = vst [vmem:[%s480 + $0x20] sm:$0xff] %v699
        %774 = vst [vmem:[%s480 + $0x28] sm:$0xff] %v705
        %775 = vst [vmem:[%s480 + $0x30] sm:$0xff] %v711
        %776 = vst [vmem:[%s480 + $0x38] sm:$0xff] %v717
        %777 = vst [vmem:[%s480 + $0x40] sm:$0xff] %v723
        %778 = vst [vmem:[%s480 + $0x48] sm:$0xff] %v729
        %779 = vst [vmem:[%s480 + $0x50] sm:$0xff] %v735
        %780 = vst [vmem:[%s480 + $0x58] sm:$0xff] %v741
        %781 = vst [vmem:[%s480 + $0x60] sm:$0xff] %v747
        %782 = vst [vmem:[%s480 + $0x68] sm:$0xff] %v753
        %783 = vst [vmem:[%s480 + $0x70] sm:$0xff] %v759
        %784 = vst [vmem:[%s480 + $0x78] sm:$0xff] %v765
        %785 = vst [vmem:[%s487] sm:$0xff] %v677
        %786 = vst [vmem:[%s487 + $0x8] sm:$0xff] %v683
        %787 = vst [vmem:[%s487 + $0x10] sm:$0xff] %v689
        %788 = vst [vmem:[%s487 + $0x18] sm:$0xff] %v695
        %789 = vst [vmem:[%s487 + $0x20] sm:$0xff] %v701
        %790 = vst [vmem:[%s487 + $0x28] sm:$0xff] %v707
        %791 = vst [vmem:[%s487 + $0x30] sm:$0xff] %v713
        %792 = vst [vmem:[%s487 + $0x38] sm:$0xff] %v719
        %793 = vst [vmem:[%s487 + $0x40] sm:$0xff] %v725
        %794 = vst [vmem:[%s487 + $0x48] sm:$0xff] %v731
        %795 = vst [vmem:[%s487 + $0x50] sm:$0xff] %v737
        %796 = vst [vmem:[%s487 + $0x58] sm:$0xff] %v743
        %797 = vst [vmem:[%s487 + $0x60] sm:$0xff] %v749
        %798 = vst [vmem:[%s487 + $0x68] sm:$0xff] %v755
        %799 = vst [vmem:[%s487 + $0x70] sm:$0xff] %v761
        %800 = vst [vmem:[%s487 + $0x78] sm:$0xff] %v767
        %v801 = vld [vmem:[%s4] sm:$0xff]
        %v802 = vld [vmem:[%s4 + $0x8] sm:$0xff]
        %v803 = vld [vmem:[%s4 + $0x10] sm:$0xff]
        %v804 = vld [vmem:[%s4 + $0x18] sm:$0xff]
        %v805 = vld [vmem:[%s4 + $0x20] sm:$0xff]
        %v806 = vld [vmem:[%s4 + $0x28] sm:$0xff]
        %v807 = vld [vmem:[%s4 + $0x30] sm:$0xff]
        %v808 = vld [vmem:[%s4 + $0x38] sm:$0xff]
        %v809 = vld [vmem:[%s4 + $0x40] sm:$0xff]
        %v810 = vld [vmem:[%s4 + $0x48] sm:$0xff]
        %v811 = vld [vmem:[%s4 + $0x50] sm:$0xff]
        %v812 = vld [vmem:[%s4 + $0x58] sm:$0xff]
        %v813 = vld [vmem:[%s4 + $0x60] sm:$0xff]
        %v814 = vld [vmem:[%s4 + $0x68] sm:$0xff]
        %v815 = vld [vmem:[%s4 + $0x70] sm:$0xff]
        %v816 = vld [vmem:[%s4 + $0x78] sm:$0xff]
        %v817 = vld [vmem:[%s445] sm:$0xff]
        %v818 = vld [vmem:[%s445 + $0x8] sm:$0xff]
        %v819 = vld [vmem:[%s445 + $0x10] sm:$0xff]
        %v820 = vld [vmem:[%s445 + $0x18] sm:$0xff]
        %v821 = vld [vmem:[%s5] sm:$0xff]
        %v822 = vld [vmem:[%s5 + $0x8] sm:$0xff]
        %v823 = vld [vmem:[%s5 + $0x10] sm:$0xff]
        %v824 = vld [vmem:[%s5 + $0x18] sm:$0xff]
        %v825 = vld [vmem:[%s5 + $0x20] sm:$0xff]
        %v826 = vld [vmem:[%s5 + $0x28] sm:$0xff]
        %v827 = vld [vmem:[%s5 + $0x30] sm:$0xff]
        %v828 = vld [vmem:[%s5 + $0x38] sm:$0xff]
        %v829 = vld [vmem:[%s5 + $0x40] sm:$0xff]
        %v830 = vld [vmem:[%s5 + $0x48] sm:$0xff]
        %v831 = vld [vmem:[%s5 + $0x50] sm:$0xff]
        %v832 = vld [vmem:[%s5 + $0x58] sm:$0xff]
        %v833 = vld [vmem:[%s5 + $0x60] sm:$0xff]
        %v834 = vld [vmem:[%s5 + $0x68] sm:$0xff]
        %v835 = vld [vmem:[%s5 + $0x70] sm:$0xff]
        %v836 = vld [vmem:[%s5 + $0x78] sm:$0xff]
        %838 = vset.pattern.permute.xlu0 0
        %839 = vperm.xlu0 %838, %v821
        %v840 = vpop.permute.xlu0 %839
        %843 = vset.pattern.permute.xlu0 0
        %844 = vperm.xlu0 %843, %v822
        %v845 = vpop.permute.xlu0 %844
        %848 = vset.pattern.permute.xlu0 0
        %849 = vperm.xlu0 %848, %v823
        %v850 = vpop.permute.xlu0 %849
        %853 = vset.pattern.permute.xlu0 0
        %854 = vperm.xlu0 %853, %v824
        %v855 = vpop.permute.xlu0 %854
        %858 = vset.pattern.permute.xlu0 0
        %859 = vperm.xlu0 %858, %v825
        %v860 = vpop.permute.xlu0 %859
        %863 = vset.pattern.permute.xlu0 0
        %864 = vperm.xlu0 %863, %v826
        %v865 = vpop.permute.xlu0 %864
        %868 = vset.pattern.permute.xlu0 0
        %869 = vperm.xlu0 %868, %v827
        %v870 = vpop.permute.xlu0 %869
        %873 = vset.pattern.permute.xlu0 0
        %874 = vperm.xlu0 %873, %v828
        %v875 = vpop.permute.xlu0 %874
        %878 = vset.pattern.permute.xlu0 0
        %879 = vperm.xlu0 %878, %v829
        %v880 = vpop.permute.xlu0 %879
        %883 = vset.pattern.permute.xlu0 0
        %884 = vperm.xlu0 %883, %v830
        %v885 = vpop.permute.xlu0 %884
        %888 = vset.pattern.permute.xlu0 0
        %889 = vperm.xlu0 %888, %v831
        %v890 = vpop.permute.xlu0 %889
        %893 = vset.pattern.permute.xlu0 0
        %894 = vperm.xlu0 %893, %v832
        %v895 = vpop.permute.xlu0 %894
        %898 = vset.pattern.permute.xlu0 0
        %899 = vperm.xlu0 %898, %v833
        %v900 = vpop.permute.xlu0 %899
        %903 = vset.pattern.permute.xlu0 0
        %904 = vperm.xlu0 %903, %v834
        %v905 = vpop.permute.xlu0 %904
        %908 = vset.pattern.permute.xlu0 0
        %909 = vperm.xlu0 %908, %v835
        %v910 = vpop.permute.xlu0 %909
        %913 = vset.pattern.permute.xlu0 0
        %914 = vperm.xlu0 %913, %v836
        %v915 = vpop.permute.xlu0 %914
        %v918 = vsel %vm559, %v801, 0
        %v921 = vsel %vm559, %v802, 0
        %v924 = vsel %vm559, %v803, 0
        %v927 = vsel %vm559, %v804, 0
        %v930 = vsel %vm559, %v805, 0
        %v933 = vsel %vm559, %v806, 0
        %v936 = vsel %vm559, %v807, 0
        %v939 = vsel %vm559, %v808, 0
        %v942 = vsel %vm559, %v809, 0
        %v945 = vsel %vm559, %v810, 0
        %v948 = vsel %vm559, %v811, 0
        %v951 = vsel %vm559, %v812, 0
        %v954 = vsel %vm559, %v813, 0
        %v957 = vsel %vm559, %v814, 0
        %v960 = vsel %vm559, %v815, 0
        %v963 = vsel %vm559, %v816, 0
        %965 = vmatprep.subr.mxu0 0.0
        %966 = vmatpush1.msra.mxu0 %v817
        %967 = vmatprep.subr.mxu0 0.0
        %968 = vmatpush1.msra.mxu0 %v818
        %969 = vmatprep.subr.mxu0 0.0
        %970 = vmatpush1.msra.mxu0 %v819
        %971 = vmatprep.subr.mxu0 0.0
        %972 = vmatpush1.msra.mxu0 %v820
        %973 = vmatprep.subr.mxu0 0.0
        %974 = vmatpush1.msra.mxu0 0.0
        %975 = vmatprep.subr.mxu0 0.0
        %976 = vmatpush1.msra.mxu0 0.0
        %977 = vmatprep.subr.mxu0 0.0
        %978 = vmatpush1.msra.mxu0 0.0
        %979 = vmatprep.subr.mxu0 0.0
        %980 = vmatpush1.msra.mxu0 0.0
        %981 = vmatprep.subr.mxu0 0.0
        %982 = vmatpush1.msra.mxu0 0.0
        %983 = vmatprep.subr.mxu0 0.0
        %984 = vmatpush1.msra.mxu0 0.0
        %985 = vmatprep.subr.mxu0 0.0
        %986 = vmatpush1.msra.mxu0 0.0
        %987 = vmatprep.subr.mxu0 0.0
        %988 = vmatpush1.msra.mxu0 0.0
        %989 = vmatprep.subr.mxu0 0.0
        %990 = vmatpush1.msra.mxu0 0.0
        %991 = vmatprep.subr.mxu0 0.0
        %992 = vmatpush1.msra.mxu0 0.0
        %993 = vmatprep.subr.mxu0 0.0
        %994 = vmatpush1.msra.mxu0 0.0
        %995 = vmatprep.subr.mxu0 0.0
        %996 = vmatpush1.msra.mxu0 0.0
        %997 = vmatprep.subr.mxu0 0.0
        %998 = vmatpush1.msra.mxu0 0.0
        %999 = vmatprep.subr.mxu0 0.0
        %1000 = vmatpush1.msra.mxu0 0.0
        %1001 = vmatprep.subr.mxu0 0.0
        %1002 = vmatpush1.msra.mxu0 0.0
        %1003 = vmatprep.subr.mxu0 0.0
        %1004 = vmatpush1.msra.mxu0 0.0
        %1005 = vmatprep.subr.mxu0 0.0
        %1006 = vmatpush1.msra.mxu0 0.0
        %1007 = vmatprep.subr.mxu0 0.0
        %1008 = vmatpush1.msra.mxu0 0.0
        %1009 = vmatprep.subr.mxu0 0.0
        %1010 = vmatpush1.msra.mxu0 0.0
        %1011 = vmatprep.subr.mxu0 0.0
        %1012 = vmatpush1.msra.mxu0 0.0
        %1013 = vmatprep.subr.mxu0 0.0
        %1014 = vmatpush1.msra.mxu0 0.0
        %1015 = vmatprep.subr.mxu0 0.0
        %1016 = vmatpush1.msra.mxu0 0.0
        %1017 = vmatprep.subr.mxu0 0.0
        %1018 = vmatpush1.msra.mxu0 0.0
        %1019 = vmatprep.subr.mxu0 0.0
        %1020 = vmatpush1.msra.mxu0 0.0
        %1021 = vmatprep.subr.mxu0 0.0
        %1022 = vmatpush1.msra.mxu0 0.0
        %1023 = vmatprep.subr.mxu0 0.0
        %1024 = vmatpush1.msra.mxu0 0.0
        %1025 = vmatprep.subr.mxu0 0.0
        %1026 = vmatpush1.msra.mxu0 0.0
        %1027 = vmatprep.subr.mxu0 0.0
        %1028 = vmatpush1.msra.mxu0 0.0
        %1029 = vmatprep.mubr.f32.mxu0 0.0
        %1030 = vmatmul.mubr.f32.gmra.mrb[0].mxu0 %v918
        %v1031 = vpop.f32.mrb[0].mxu0
        %v1032 = vadd.f32 %v840, %v1031
        %v1033 = vpop.f32.mrb[0].mxu0
        %1034 = vmatprep.mubr.f32.mxu0 0.0
        %1035 = vmatmul.mubr.f32.gmra.mrb[0].mxu0 %v921
        %v1036 = vpop.f32.mrb[0].mxu0
        %v1037 = vadd.f32 %v845, %v1036
        %v1038 = vpop.f32.mrb[0].mxu0
        %1039 = vmatprep.mubr.f32.mxu0 0.0
        %1040 = vmatmul.mubr.f32.gmra.mrb[0].mxu0 %v924
        %v1041 = vpop.f32.mrb[0].mxu0
        %v1042 = vadd.f32 %v850, %v1041
        %v1043 = vpop.f32.mrb[0].mxu0
        %1044 = vmatprep.mubr.f32.mxu0 0.0
        %1045 = vmatmul.mubr.f32.gmra.mrb[0].mxu0 %v927
        %v1046 = vpop.f32.mrb[0].mxu0
        %v1047 = vadd.f32 %v855, %v1046
        %v1048 = vpop.f32.mrb[0].mxu0
        %1049 = vmatprep.mubr.f32.mxu0 0.0
        %1050 = vmatmul.mubr.f32.gmra.mrb[0].mxu0 %v930
        %v1051 = vpop.f32.mrb[0].mxu0
        %v1052 = vadd.f32 %v860, %v1051
        %v1053 = vpop.f32.mrb[0].mxu0
        %1054 = vmatprep.mubr.f32.mxu0 0.0
        %1055 = vmatmul.mubr.f32.gmra.mrb[0].mxu0 %v933
        %v1056 = vpop.f32.mrb[0].mxu0
        %v1057 = vadd.f32 %v865, %v1056
        %v1058 = vpop.f32.mrb[0].mxu0
        %1059 = vmatprep.mubr.f32.mxu0 0.0
        %1060 = vmatmul.mubr.f32.gmra.mrb[0].mxu0 %v936
        %v1061 = vpop.f32.mrb[0].mxu0
        %v1062 = vadd.f32 %v870, %v1061
        %v1063 = vpop.f32.mrb[0].mxu0
        %1064 = vmatprep.mubr.f32.mxu0 0.0
        %1065 = vmatmul.mubr.f32.gmra.mrb[0].mxu0 %v939
        %v1066 = vpop.f32.mrb[0].mxu0
        %v1067 = vadd.f32 %v875, %v1066
        %v1068 = vpop.f32.mrb[0].mxu0
        %1069 = vmatprep.mubr.f32.mxu0 0.0
        %1070 = vmatmul.mubr.f32.gmra.mrb[0].mxu0 %v942
        %v1071 = vpop.f32.mrb[0].mxu0
        %v1072 = vadd.f32 %v880, %v1071
        %v1073 = vpop.f32.mrb[0].mxu0
        %1074 = vmatprep.mubr.f32.mxu0 0.0
        %1075 = vmatmul.mubr.f32.gmra.mrb[0].mxu0 %v945
        %v1076 = vpop.f32.mrb[0].mxu0
        %v1077 = vadd.f32 %v885, %v1076
        %v1078 = vpop.f32.mrb[0].mxu0
        %1079 = vmatprep.mubr.f32.mxu0 0.0
        %1080 = vmatmul.mubr.f32.gmra.mrb[0].mxu0 %v948
        %v1081 = vpop.f32.mrb[0].mxu0
        %v1082 = vadd.f32 %v890, %v1081
        %v1083 = vpop.f32.mrb[0].mxu0
        %1084 = vmatprep.mubr.f32.mxu0 0.0
        %1085 = vmatmul.mubr.f32.gmra.mrb[0].mxu0 %v951
        %v1086 = vpop.f32.mrb[0].mxu0
        %v1087 = vadd.f32 %v895, %v1086
        %v1088 = vpop.f32.mrb[0].mxu0
        %1089 = vmatprep.mubr.f32.mxu0 0.0
        %1090 = vmatmul.mubr.f32.gmra.mrb[0].mxu0 %v954
        %v1091 = vpop.f32.mrb[0].mxu0
        %v1092 = vadd.f32 %v900, %v1091
        %v1093 = vpop.f32.mrb[0].mxu0
        %1094 = vmatprep.mubr.f32.mxu0 0.0
        %1095 = vmatmul.mubr.f32.gmra.mrb[0].mxu0 %v957
        %v1096 = vpop.f32.mrb[0].mxu0
        %v1097 = vadd.f32 %v905, %v1096
        %v1098 = vpop.f32.mrb[0].mxu0
        %1099 = vmatprep.mubr.f32.mxu0 0.0
        %1100 = vmatmul.mubr.f32.gmra.mrb[0].mxu0 %v960
        %v1101 = vpop.f32.mrb[0].mxu0
        %v1102 = vadd.f32 %v910, %v1101
        %v1103 = vpop.f32.mrb[0].mxu0
        %1104 = vmatprep.mubr.f32.mxu0 0.0
        %1105 = vmatmul.mubr.f32.gmra.mrb[0].mxu0 %v963
        %v1106 = vpop.f32.mrb[0].mxu0
        %v1107 = vadd.f32 %v915, %v1106
        %v1108 = vpop.f32.mrb[0].mxu0
        %1109 = vdwg.mxu0
        %1110 = vst [vmem:[%s494] sm:$0xff] %v1032
        %1111 = vst [vmem:[%s494 + $0x8] sm:$0xff] %v1037
        %1112 = vst [vmem:[%s494 + $0x10] sm:$0xff] %v1042
        %1113 = vst [vmem:[%s494 + $0x18] sm:$0xff] %v1047
        %1114 = vst [vmem:[%s494 + $0x20] sm:$0xff] %v1052
        %1115 = vst [vmem:[%s494 + $0x28] sm:$0xff] %v1057
        %1116 = vst [vmem:[%s494 + $0x30] sm:$0xff] %v1062
        %1117 = vst [vmem:[%s494 + $0x38] sm:$0xff] %v1067
        %1118 = vst [vmem:[%s494 + $0x40] sm:$0xff] %v1072
        %1119 = vst [vmem:[%s494 + $0x48] sm:$0xff] %v1077
        %1120 = vst [vmem:[%s494 + $0x50] sm:$0xff] %v1082
        %1121 = vst [vmem:[%s494 + $0x58] sm:$0xff] %v1087
        %1122 = vst [vmem:[%s494 + $0x60] sm:$0xff] %v1092
        %1123 = vst [vmem:[%s494 + $0x68] sm:$0xff] %v1097
        %1124 = vst [vmem:[%s494 + $0x70] sm:$0xff] %v1102
        %1125 = vst [vmem:[%s494 + $0x78] sm:$0xff] %v1107
        %v1126 = vld [vmem:[%s6] sm:$0xff]
        %v1127 = vld [vmem:[%s6 + $0x8] sm:$0xff]
        %v1128 = vld [vmem:[%s6 + $0x10] sm:$0xff]
        %v1129 = vld [vmem:[%s6 + $0x18] sm:$0xff]
        %v1130 = vld [vmem:[%s6 + $0x20] sm:$0xff]
        %v1131 = vld [vmem:[%s6 + $0x28] sm:$0xff]
        %v1132 = vld [vmem:[%s6 + $0x30] sm:$0xff]
        %v1133 = vld [vmem:[%s6 + $0x38] sm:$0xff]
        %v1134 = vld [vmem:[%s6 + $0x40] sm:$0xff]
        %v1135 = vld [vmem:[%s6 + $0x48] sm:$0xff]
        %v1136 = vld [vmem:[%s6 + $0x50] sm:$0xff]
        %v1137 = vld [vmem:[%s6 + $0x58] sm:$0xff]
        %v1138 = vld [vmem:[%s6 + $0x60] sm:$0xff]
        %v1139 = vld [vmem:[%s6 + $0x68] sm:$0xff]
        %v1140 = vld [vmem:[%s6 + $0x70] sm:$0xff]
        %v1141 = vld [vmem:[%s6 + $0x78] sm:$0xff]
        %1142 = vmatprep.subr.mxu0 0.0
        %1143 = vmatpush1.msra.mxu0 %v1126
        %1144 = vmatprep.subr.mxu0 0.0
        %1145 = vmatpush1.msra.mxu0 %v1127
        %1146 = vmatprep.subr.mxu0 0.0
        %1147 = vmatpush1.msra.mxu0 %v1128
        %1148 = vmatprep.subr.mxu0 0.0
        %1149 = vmatpush1.msra.mxu0 %v1129
        %1150 = vmatprep.subr.mxu0 0.0
        %1151 = vmatpush1.msra.mxu0 %v1130
        %1152 = vmatprep.subr.mxu0 0.0
        %1153 = vmatpush1.msra.mxu0 %v1131
        %1154 = vmatprep.subr.mxu0 0.0
        %1155 = vmatpush1.msra.mxu0 %v1132
        %1156 = vmatprep.subr.mxu0 0.0
        %1157 = vmatpush1.msra.mxu0 %v1133
        %1158 = vmatprep.subr.mxu0 0.0
        %1159 = vmatpush1.msra.mxu0 %v1134
        %1160 = vmatprep.subr.mxu0 0.0
        %1161 = vmatpush1.msra.mxu0 %v1135
        %1162 = vmatprep.subr.mxu0 0.0
        %1163 = vmatpush1.msra.mxu0 %v1136
        %1164 = vmatprep.subr.mxu0 0.0
        %1165 = vmatpush1.msra.mxu0 %v1137
        %1166 = vmatprep.subr.mxu0 0.0
        %1167 = vmatpush1.msra.mxu0 %v1138
        %1168 = vmatprep.subr.mxu0 0.0
        %1169 = vmatpush1.msra.mxu0 %v1139
        %1170 = vmatprep.subr.mxu0 0.0
        %1171 = vmatpush1.msra.mxu0 %v1140
        %1172 = vmatprep.subr.mxu0 0.0
        %1173 = vmatpush1.msra.mxu0 %v1141
        %1174 = vmatprep.subr.mxu0 0.0
        %1175 = vmatpush1.msra.mxu0 0.0
        %1176 = vmatprep.subr.mxu0 0.0
        %1177 = vmatpush1.msra.mxu0 0.0
        %1178 = vmatprep.subr.mxu0 0.0
        %1179 = vmatpush1.msra.mxu0 0.0
        %1180 = vmatprep.subr.mxu0 0.0
        %1181 = vmatpush1.msra.mxu0 0.0
        %1182 = vmatprep.subr.mxu0 0.0
        %1183 = vmatpush1.msra.mxu0 0.0
        %1184 = vmatprep.subr.mxu0 0.0
        %1185 = vmatpush1.msra.mxu0 0.0
        %1186 = vmatprep.subr.mxu0 0.0
        %1187 = vmatpush1.msra.mxu0 0.0
        %1188 = vmatprep.subr.mxu0 0.0
        %1189 = vmatpush1.msra.mxu0 0.0
        %1190 = vmatprep.subr.mxu0 0.0
        %1191 = vmatpush1.msra.mxu0 0.0
        %1192 = vmatprep.subr.mxu0 0.0
        %1193 = vmatpush1.msra.mxu0 0.0
        %1194 = vmatprep.subr.mxu0 0.0
        %1195 = vmatpush1.msra.mxu0 0.0
        %1196 = vmatprep.subr.mxu0 0.0
        %1197 = vmatpush1.msra.mxu0 0.0
        %1198 = vmatprep.subr.mxu0 0.0
        %1199 = vmatpush1.msra.mxu0 0.0
        %1200 = vmatprep.subr.mxu0 0.0
        %1201 = vmatpush1.msra.mxu0 0.0
        %1202 = vmatprep.subr.mxu0 0.0
        %1203 = vmatpush1.msra.mxu0 0.0
        %1204 = vmatprep.subr.mxu0 0.0
        %1205 = vmatpush1.msra.mxu0 0.0
        %1206 = vmatprep.mubr.f32.mxu0 0.0
        %1207 = vmatmul.mubr.f32.gmra.mrb[0].mxu0 %v677
        %v1208 = vpop.f32.mrb[0].mxu0
        %v1209 = vadd.f32 0.0, %v1208
        %v1210 = vpop.f32.mrb[0].mxu0
        %1211 = vmatprep.mubr.f32.mxu0 0.0
        %1212 = vmatmul.mubr.f32.gmra.mrb[0].mxu0 %v683
        %v1213 = vpop.f32.mrb[0].mxu0
        %v1214 = vadd.f32 0.0, %v1213
        %v1215 = vpop.f32.mrb[0].mxu0
        %1216 = vmatprep.mubr.f32.mxu0 0.0
        %1217 = vmatmul.mubr.f32.gmra.mrb[0].mxu0 %v689
        %v1218 = vpop.f32.mrb[0].mxu0
        %v1219 = vadd.f32 0.0, %v1218
        %v1220 = vpop.f32.mrb[0].mxu0
        %1221 = vmatprep.mubr.f32.mxu0 0.0
        %1222 = vmatmul.mubr.f32.gmra.mrb[0].mxu0 %v695
        %v1223 = vpop.f32.mrb[0].mxu0
        %v1224 = vadd.f32 0.0, %v1223
        %v1225 = vpop.f32.mrb[0].mxu0
        %1226 = vmatprep.mubr.f32.mxu0 0.0
        %1227 = vmatmul.mubr.f32.gmra.mrb[0].mxu0 %v701
        %v1228 = vpop.f32.mrb[0].mxu0
        %v1229 = vadd.f32 0.0, %v1228
        %v1230 = vpop.f32.mrb[0].mxu0
        %1231 = vmatprep.mubr.f32.mxu0 0.0
        %1232 = vmatmul.mubr.f32.gmra.mrb[0].mxu0 %v707
        %v1233 = vpop.f32.mrb[0].mxu0
        %v1234 = vadd.f32 0.0, %v1233
        %v1235 = vpop.f32.mrb[0].mxu0
        %1236 = vmatprep.mubr.f32.mxu0 0.0
        %1237 = vmatmul.mubr.f32.gmra.mrb[0].mxu0 %v713
        %v1238 = vpop.f32.mrb[0].mxu0
        %v1239 = vadd.f32 0.0, %v1238
        %v1240 = vpop.f32.mrb[0].mxu0
        %1241 = vmatprep.mubr.f32.mxu0 0.0
        %1242 = vmatmul.mubr.f32.gmra.mrb[0].mxu0 %v719
        %v1243 = vpop.f32.mrb[0].mxu0
        %v1244 = vadd.f32 0.0, %v1243
        %v1245 = vpop.f32.mrb[0].mxu0
        %1246 = vmatprep.mubr.f32.mxu0 0.0
        %1247 = vmatmul.mubr.f32.gmra.mrb[0].mxu0 %v725
        %v1248 = vpop.f32.mrb[0].mxu0
        %v1249 = vadd.f32 0.0, %v1248
        %v1250 = vpop.f32.mrb[0].mxu0
        %1251 = vmatprep.mubr.f32.mxu0 0.0
        %1252 = vmatmul.mubr.f32.gmra.mrb[0].mxu0 %v731
        %v1253 = vpop.f32.mrb[0].mxu0
        %v1254 = vadd.f32 0.0, %v1253
        %v1255 = vpop.f32.mrb[0].mxu0
        %1256 = vmatprep.mubr.f32.mxu0 0.0
        %1257 = vmatmul.mubr.f32.gmra.mrb[0].mxu0 %v737
        %v1258 = vpop.f32.mrb[0].mxu0
        %v1259 = vadd.f32 0.0, %v1258
        %v1260 = vpop.f32.mrb[0].mxu0
        %1261 = vmatprep.mubr.f32.mxu0 0.0
        %1262 = vmatmul.mubr.f32.gmra.mrb[0].mxu0 %v743
        %v1263 = vpop.f32.mrb[0].mxu0
        %v1264 = vadd.f32 0.0, %v1263
        %v1265 = vpop.f32.mrb[0].mxu0
        %1266 = vmatprep.mubr.f32.mxu0 0.0
        %1267 = vmatmul.mubr.f32.gmra.mrb[0].mxu0 %v749
        %v1268 = vpop.f32.mrb[0].mxu0
        %v1269 = vadd.f32 0.0, %v1268
        %v1270 = vpop.f32.mrb[0].mxu0
        %1271 = vmatprep.mubr.f32.mxu0 0.0
        %1272 = vmatmul.mubr.f32.gmra.mrb[0].mxu0 %v755
        %v1273 = vpop.f32.mrb[0].mxu0
        %v1274 = vadd.f32 0.0, %v1273
        %v1275 = vpop.f32.mrb[0].mxu0
        %1276 = vmatprep.mubr.f32.mxu0 0.0
        %1277 = vmatmul.mubr.f32.gmra.mrb[0].mxu0 %v761
        %v1278 = vpop.f32.mrb[0].mxu0
        %v1279 = vadd.f32 0.0, %v1278
        %v1280 = vpop.f32.mrb[0].mxu0
        %1281 = vmatprep.mubr.f32.mxu0 0.0
        %1282 = vmatmul.mubr.f32.gmra.mrb[0].mxu0 %v767
        %v1283 = vpop.f32.mrb[0].mxu0
        %v1284 = vadd.f32 0.0, %v1283
        %v1285 = vpop.f32.mrb[0].mxu0
        %1286 = vdwg.mxu0
        %vm1287 = vcmask 31744
        %1288 = vst.msk [vmem:[%s521] sm:$0xff] %vm1287, %v1209
        %1289 = vst.msk [vmem:[%s521 + $0x8] sm:$0xff] %vm1287, %v1214
        %1290 = vst.msk [vmem:[%s521 + $0x10] sm:$0xff] %vm1287, %v1219
        %1291 = vst.msk [vmem:[%s521 + $0x18] sm:$0xff] %vm1287, %v1224
        %1292 = vst.msk [vmem:[%s521 + $0x20] sm:$0xff] %vm1287, %v1229
        %1293 = vst.msk [vmem:[%s521 + $0x28] sm:$0xff] %vm1287, %v1234
        %1294 = vst.msk [vmem:[%s521 + $0x30] sm:$0xff] %vm1287, %v1239
        %1295 = vst.msk [vmem:[%s521 + $0x38] sm:$0xff] %vm1287, %v1244
        %1296 = vst.msk [vmem:[%s521 + $0x40] sm:$0xff] %vm1287, %v1249
        %1297 = vst.msk [vmem:[%s521 + $0x48] sm:$0xff] %vm1287, %v1254
        %1298 = vst.msk [vmem:[%s521 + $0x50] sm:$0xff] %vm1287, %v1259
        %1299 = vst.msk [vmem:[%s521 + $0x58] sm:$0xff] %vm1287, %v1264
        %1300 = vst.msk [vmem:[%s521 + $0x60] sm:$0xff] %vm1287, %v1269
        %1301 = vst.msk [vmem:[%s521 + $0x68] sm:$0xff] %vm1287, %v1274
        %1302 = vst.msk [vmem:[%s521 + $0x70] sm:$0xff] %vm1287, %v1279
        %1303 = vst.msk [vmem:[%s521 + $0x78] sm:$0xff] %vm1287, %v1284
        %v1304 = vld [vmem:[%s7] sm:$0xf]
        %1305 = vmatprep.subr.mxu0 0.0
        %1306 = vmatpush1.msra.mxu0 %v1032
        %1307 = vmatprep.subr.mxu0 0.0
        %1308 = vmatpush1.msra.mxu0 %v1037
        %1309 = vmatprep.subr.mxu0 0.0
        %1310 = vmatpush1.msra.mxu0 %v1042
        %1311 = vmatprep.subr.mxu0 0.0
        %1312 = vmatpush1.msra.mxu0 %v1047
        %1313 = vmatprep.subr.mxu0 0.0
        %1314 = vmatpush1.msra.mxu0 %v1052
        %1315 = vmatprep.subr.mxu0 0.0
        %1316 = vmatpush1.msra.mxu0 %v1057
        %1317 = vmatprep.subr.mxu0 0.0
        %1318 = vmatpush1.msra.mxu0 %v1062
        %1319 = vmatprep.subr.mxu0 0.0
        %1320 = vmatpush1.msra.mxu0 %v1067
        %1321 = vmatprep.subr.mxu0 0.0
        %1322 = vmatpush1.msra.mxu0 %v1072
        %1323 = vmatprep.subr.mxu0 0.0
        %1324 = vmatpush1.msra.mxu0 %v1077
        %1325 = vmatprep.subr.mxu0 0.0
        %1326 = vmatpush1.msra.mxu0 %v1082
        %1327 = vmatprep.subr.mxu0 0.0
        %1328 = vmatpush1.msra.mxu0 %v1087
        %1329 = vmatprep.subr.mxu0 0.0
        %1330 = vmatpush1.msra.mxu0 %v1092
        %1331 = vmatprep.subr.mxu0 0.0
        %1332 = vmatpush1.msra.mxu0 %v1097
        %1333 = vmatprep.subr.mxu0 0.0
        %1334 = vmatpush1.msra.mxu0 %v1102
        %1335 = vmatprep.subr.mxu0 0.0
        %1336 = vmatpush1.msra.mxu0 %v1107
        %1337 = vmatprep.subr.mxu0 0.0
        %1338 = vmatpush1.msra.mxu0 0.0
        %1339 = vmatprep.subr.mxu0 0.0
        %1340 = vmatpush1.msra.mxu0 0.0
        %1341 = vmatprep.subr.mxu0 0.0
        %1342 = vmatpush1.msra.mxu0 0.0
        %1343 = vmatprep.subr.mxu0 0.0
        %1344 = vmatpush1.msra.mxu0 0.0
        %1345 = vmatprep.subr.mxu0 0.0
        %1346 = vmatpush1.msra.mxu0 0.0
        %1347 = vmatprep.subr.mxu0 0.0
        %1348 = vmatpush1.msra.mxu0 0.0
        %1349 = vmatprep.subr.mxu0 0.0
        %1350 = vmatpush1.msra.mxu0 0.0
        %1351 = vmatprep.subr.mxu0 0.0
        %1352 = vmatpush1.msra.mxu0 0.0
        %1353 = vmatprep.subr.mxu0 0.0
        %1354 = vmatpush1.msra.mxu0 0.0
        %1355 = vmatprep.subr.mxu0 0.0
        %1356 = vmatpush1.msra.mxu0 0.0
        %1357 = vmatprep.subr.mxu0 0.0
        %1358 = vmatpush1.msra.mxu0 0.0
        %1359 = vmatprep.subr.mxu0 0.0
        %1360 = vmatpush1.msra.mxu0 0.0
        %1361 = vmatprep.subr.mxu0 0.0
        %1362 = vmatpush1.msra.mxu0 0.0
        %1363 = vmatprep.subr.mxu0 0.0
        %1364 = vmatpush1.msra.mxu0 0.0
        %1365 = vmatprep.subr.mxu0 0.0
        %1366 = vmatpush1.msra.mxu0 0.0
        %1367 = vmatprep.subr.mxu0 0.0
        %1368 = vmatpush1.msra.mxu0 0.0
        %1369 = vmatprep.mubr.f32.mxu0 0.0
        %1370 = vmatmul.mubr.f32.gmra.mrb[0].mxu0 %v1304
        %v1371 = vpop.f32.mrb[0].mxu0
        %v1372 = vadd.f32 0.0, %v1371
        %v1373 = vpop.f32.mrb[0].mxu0
        %1374 = vdwg.mxu0
        %1375 = vst [vmem:[%s508] sm:$0xf] %v1372
        %s1376 = sand.u32 %s219, 1
        %s1377 = scalar_lea.sflag [#allocation4], %s1376
        %s1378 = sand.u32 %s219, 1
        %s1379 = smul.addr %s1378, 128
        %s1380 = scalar_lea.vmem [#allocation3], %s1379
        %s1381 = sand.u32 %s33, 1
        %s1382 = scalar_lea.sflag [#allocation6], %s1381
        %s1383 = sand.u32 %s245, 1
        %s1384 = smul.addr %s1383, 128
        %s1385 = scalar_lea.vmem [#allocation5], %s1384
        %s1386 = sand.u32 %s33, 1
        %s1387 = scalar_lea.sflag [#allocation6], %s1386
        %s1388 = sand.u32 %s271, 1
        %s1389 = smul.addr %s1388, 128
        %s1390 = scalar_lea.vmem [#allocation7], %s1389
        %s1391 = smul.u32 16, %s33
        %p1392 = scmp.lt.s32.totalorder %s1391, 31
        %s1393 = scalar_select %p1392, %s1391, 31
        %s1394 = smul.addr %s1393, 8
        %s1395 = scalar_lea.vmem %s11, %s1394
        %s1396 = sand.u32 %s323, 1
        %s1397 = scalar_lea.sflag [#allocation9], %s1396
        %s1398 = sand.u32 %s323, 1
        %s1399 = smul.addr %s1398, 4
        %s1400 = scalar_lea.vmem [#allocation8], %s1399
        // Predicated region
        $region91: #{tpu_custom_call.1} parent=85 // pred_check
          %p1401 = pneg %p229
        $region92: #{tpu_custom_call.1} parent=85 // pred_check_branch
          %1403 = sbr.rel (%p1401) target = $region94
        $region93: #{tpu_custom_call.1} parent=85 // pred_region
          %s1404 = smul.u32 16, %s33
          %s1406 = ssub.s32 2048, 2048
          %1407 = vsyncadd %s1377, %s1406
          %s1408 = smul.addr %s1404, 128
          %s1409 = scalar_lea.hbm %s8, %s1408
          %s1410 = sshll.u32 %s1380, 4
          %s1411 = int_to_ptr.vmem [resolvable:$true] %s1410
          %1416 = dma.vmem_to_hbm [thread:$0]  %s1411, 2048, %s1409, %s1377, 128, 128, 8
        $region94: #{tpu_custom_call.1} parent=85 // pred_fallthru
          _
        // Predicated region
        $region95: #{tpu_custom_call.1} parent=85 // pred_check
          %p1417 = pneg %p255
        $region96: #{tpu_custom_call.1} parent=85 // pred_check_branch
          %1419 = sbr.rel (%p1417) target = $region98
        $region97: #{tpu_custom_call.1} parent=85 // pred_region
          %s1420 = smul.u32 16, %s33
          %s1422 = ssub.s32 2048, 2048
          %1423 = vsyncadd %s1382, %s1422
          %s1424 = smul.addr %s1420, 128
          %s1425 = scalar_lea.hbm %s9, %s1424
          %s1426 = sshll.u32 %s1385, 4
          %s1427 = int_to_ptr.vmem [resolvable:$true] %s1426
          %1432 = dma.vmem_to_hbm [thread:$0]  %s1427, 2048, %s1425, %s1382, 128, 128, 8
        $region98: #{tpu_custom_call.1} parent=85 // pred_fallthru
          _
        // Predicated region
        $region99: #{tpu_custom_call.1} parent=85 // pred_check
          %p1433 = pneg %p281
        $region100: #{tpu_custom_call.1} parent=85 // pred_check_branch
          %1435 = sbr.rel (%p1433) target = $region102
        $region101: #{tpu_custom_call.1} parent=85 // pred_region
          %s1437 = ssub.s32 2048, 2048
          %1438 = vsyncadd %s1387, %s1437
          %s1439 = smul.addr %s33, 128
          %s1440 = scalar_lea.hbm %s10, %s1439
          %s1441 = sshll.u32 %s1390, 4
          %s1442 = int_to_ptr.vmem [resolvable:$true] %s1441
          %1447 = dma.vmem_to_hbm [thread:$0]  %s1442, 2048, %s1440, %s1387, 128, 256, 8
        $region102: #{tpu_custom_call.1} parent=85 // pred_fallthru
          _
        // Predicated region
        $region103: #{tpu_custom_call.1} parent=85 // pred_check
          %p1448 = pneg %p307
        $region104: #{tpu_custom_call.1} parent=85 // pred_check_branch
          %1450 = sbr.rel (%p1448) target = $region106
        $region105: #{tpu_custom_call.1} parent=85 // pred_region
          %s1451 = smul.u32 16, %s33
        $region106: #{tpu_custom_call.1} parent=85 // pred_fallthru
          _
        // Predicated region
        $region107: #{tpu_custom_call.1} parent=85 // pred_check
          %p1452 = pneg %p333
        $region108: #{tpu_custom_call.1} parent=85 // pred_check_branch
          %1454 = sbr.rel (%p1452) target = $region110
        $region109: #{tpu_custom_call.1} parent=85 // pred_region
          %s1456 = ssub.s32 64, 64
          %1457 = vsyncadd %s1397, %s1456
          %s1458 = smul.addr %s33, 64
          %s1459 = scalar_lea.hbm %s12, %s1458
          %s1461 = sshll.u32 %s1400, 4
          %s1462 = int_to_ptr.vmem [resolvable:$true] %s1461
          %1464 = dma.vmem_to_hbm [thread:$0]  %s1462, 64, %s1459, %s1397
        $region110: #{tpu_custom_call.1} parent=85 // pred_fallthru
          _
      $region86: #{tpu_custom_call.1} parent=5 // pred_fallthru
        _
      %p1465 = scmp.le.s32.totalorder 2, %s28
      // Predicated region
      $region111: #{tpu_custom_call.1} parent=5 // pred_check
        %p1466 = pneg %p1465
      $region112: #{tpu_custom_call.1} parent=5 // pred_check_branch
        %1468 = sbr.rel (%p1466) target = $region114
      $region113: #{tpu_custom_call.1} parent=5 // pred_region
        %s1469 = ssub.s32 %s28, 2
        // Predicated region
        $region115: #{tpu_custom_call.1} parent=113 // pred_check
          %p1470 = pneg %p235
        $region116: #{tpu_custom_call.1} parent=113 // pred_check_branch
          %1472 = sbr.rel (%p1470) target = $region118
        $region117: #{tpu_custom_call.1} parent=113 // pred_region
          %s1473 = sand.u32 %s220, 1
          %s1474 = scalar_lea.sflag [#allocation4], %s1473
          %s1475 = sand.u32 %s220, 1
          %s1476 = smul.addr %s1475, 128
          %s1477 = scalar_lea.vmem [#allocation3], %s1476
          %1478 = dma.done %s1474, 2048
        $region118: #{tpu_custom_call.1} parent=113 // pred_fallthru
          _
        // Predicated region
        $region119: #{tpu_custom_call.1} parent=113 // pred_check
          %p1479 = pneg %p261
        $region120: #{tpu_custom_call.1} parent=113 // pred_check_branch
          %1481 = sbr.rel (%p1479) target = $region122
        $region121: #{tpu_custom_call.1} parent=113 // pred_region
          %s1482 = sand.u32 %s34, 1
          %s1483 = scalar_lea.sflag [#allocation6], %s1482
          %s1484 = sand.u32 %s246, 1
          %s1485 = smul.addr %s1484, 128
          %s1486 = scalar_lea.vmem [#allocation5], %s1485
          %1487 = dma.done %s1483, 2048
        $region122: #{tpu_custom_call.1} parent=113 // pred_fallthru
          _
        // Predicated region
        $region123: #{tpu_custom_call.1} parent=113 // pred_check
          %p1488 = pneg %p287
        $region124: #{tpu_custom_call.1} parent=113 // pred_check_branch
          %1490 = sbr.rel (%p1488) target = $region126
        $region125: #{tpu_custom_call.1} parent=113 // pred_region
          %s1491 = sand.u32 %s34, 1
          %s1492 = scalar_lea.sflag [#allocation6], %s1491
          %s1493 = sand.u32 %s272, 1
          %s1494 = smul.addr %s1493, 128
          %s1495 = scalar_lea.vmem [#allocation7], %s1494
          %1496 = dma.done %s1492, 2048
        $region126: #{tpu_custom_call.1} parent=113 // pred_fallthru
          _
        // Predicated region
        $region127: #{tpu_custom_call.1} parent=113 // pred_check
          %p1497 = pneg %p313
        $region128: #{tpu_custom_call.1} parent=113 // pred_check_branch
          %1499 = sbr.rel (%p1497) target = $region130
        $region129: #{tpu_custom_call.1} parent=113 // pred_region
          %s1500 = smul.u32 16, %s34
          %p1501 = scmp.lt.s32.totalorder %s1500, 31
          %s1502 = scalar_select %p1501, %s1500, 31
          %s1503 = smul.addr %s1502, 8
          %s1504 = scalar_lea.vmem %s11, %s1503
        $region130: #{tpu_custom_call.1} parent=113 // pred_fallthru
          _
        // Predicated region
        $region131: #{tpu_custom_call.1} parent=113 // pred_check
          %p1505 = pneg %p339
        $region132: #{tpu_custom_call.1} parent=113 // pred_check_branch
          %1507 = sbr.rel (%p1505) target = $region134
        $region133: #{tpu_custom_call.1} parent=113 // pred_region
          %s1508 = sand.u32 %s324, 1
          %s1509 = scalar_lea.sflag [#allocation9], %s1508
          %s1510 = sand.u32 %s324, 1
          %s1511 = smul.addr %s1510, 4
          %s1512 = scalar_lea.vmem [#allocation8], %s1511
          %1513 = dma.done %s1509, 64
        $region134: #{tpu_custom_call.1} parent=113 // pred_fallthru
          _
      $region114: #{tpu_custom_call.1} parent=5 // pred_fallthru
        _
    $region6: #{tpu_custom_call.1} parent=1 // loop_footer
      %s32 = sadd.s32 1, %s28
    $region7: #{tpu_custom_call.1} parent=1 // loop_footer_branch
      %27 = sbr.rel target = $region3
    $region8: #{tpu_custom_call.1} parent=1 // loop_exit
      _
    %1514 = vsyncpa [#allocation4], 1
    %s1515 = scalar_lea.sflag [#allocation4], 1
    %1516 = vsyncpa %s1515, 1
    %1517 = vsyncpa [#allocation6], 1
    %s1518 = scalar_lea.sflag [#allocation6], 1
    %1519 = vsyncpa %s1518, 1
    %1520 = vsyncpa [#allocation9], 1
    %s1521 = scalar_lea.sflag [#allocation9], 1
    %1522 = vsyncpa %s1521, 1

</llo_original>
